<compile_context>
chip_gen: v6e
topology: v6e:2x2x1
jax: 0.10.0
libtpu: 0.0.40
codegen_flags: <defaults>
</compile_context>

<pallas_src>
import jax
import jax.numpy as jnp
from jax.experimental import pallas as pl
from jax.experimental.pallas import tpu as pltpu


def _round_up(x, m):
    return (x + m - 1) // m * m


def _leaky_relu(v, slope=0.2):
    return jnp.where(v > 0, v, slope * v)


def _make_rrdb_kernel(H, W, act_off, n_pos, ext_len, mxu_dtype):
    Hp, Wp = H + 2, W + 2

    # Static lane offsets of the 9 conv taps inside the extended flat buffer.
    tap_starts = [act_off + (dy - 1) * Wp + (dx - 1)
                  for dy in range(3) for dx in range(3)]

    def conv3x3(src, w_ref, b_ref):
        # src: (C, ext_len) extended flat activation (value, channels-major).
        # Stack the 9 shifted views along the contraction dim and do a single
        # im2col matmul: (C, 9C) @ (9C, n_pos) -> (C, n_pos), f32 accumulate.
        patches = jnp.concatenate(
            [src[:, s:s + n_pos] for s in tap_starts], axis=0)
        acc = jnp.dot(w_ref[...].astype(mxu_dtype),
                      patches.astype(mxu_dtype),
                      preferred_element_type=jnp.float32)
        return acc + b_ref[...]                       # (C, n_pos) + (C, 1)

    def kernel(x_ref, w1_ref, w2_ref, w3_ref, b1_ref, b2_ref, b3_ref,
               mask_ref, out_ref, ext_ref):
        # x_ref : (1, C, ext_len)  extended flat padded input (zeros in halo)
        # w*_ref: (C, 9C)          im2col-repacked weights
        # b*_ref: (C, 1)           biases
        # mask  : (1, n_pos)       1.0 at interior (valid) positions else 0.0
        # out   : (1, C, n_pos)    flat padded output (interior valid)
        # ext   : (C, ext_len)     VMEM scratch holding padded activations
        C = ext_ref.shape[0]

        # Zero only the head/tail halo of the scratch (lane-aligned, 128 wide
        # each); the interior region is fully overwritten before every read.
        ext_ref[:, 0:act_off] = jnp.zeros((C, act_off), jnp.float32)
        ext_ref[:, act_off + n_pos:ext_len] = jnp.zeros(
            (C, ext_len - act_off - n_pos), jnp.float32)

        x = x_ref[0]                                  # (C, ext_len)
        mask = mask_ref[...]                          # (1, n_pos)

        # conv1 + leaky relu; mask re-zeroes the spatial halo positions.
        a = _leaky_relu(conv3x3(x, w1_ref, b1_ref)) * mask
        ext_ref[:, act_off:act_off + n_pos] = a       # lane-aligned store

        # conv2 + leaky relu
        a = _leaky_relu(conv3x3(ext_ref[...], w2_ref, b2_ref)) * mask
        ext_ref[:, act_off:act_off + n_pos] = a

        # conv3 (no activation) + fused residual add.  Non-interior positions
        # hold garbage and are sliced away by the wrapper.
        a = conv3x3(ext_ref[...], w3_ref, b3_ref)
        out_ref[0] = x[:, act_off:act_off + n_pos] + a

    return kernel


def rrdb_forward(x_nchw, w1, b1, w2, b2, w3, b3, mxu_dtype=jnp.float32):
    """x_nchw: (N, C, H, W) f32.  Weights HWIO (3,3,C,C), biases (C,)."""
    N, C, H, W = x_nchw.shape
    Hp, Wp = H + 2, W + 2
    P = Hp * Wp                                  # flattened padded positions
    n_pos = _round_up(P, 128)                    # lane-dense position count
    halo = max(128, _round_up(Wp + 1, 128))      # lane-aligned halo size
    act_off = halo
    ext_len = act_off + n_pos + halo             # extended flat length

    f32 = jnp.float32

    # Extended flattened padded input: zeros everywhere outside the image.
    xp = jnp.pad(x_nchw.astype(f32), ((0, 0), (0, 0), (1, 1), (1, 1)))
    x_ext = jnp.zeros((N, C, ext_len), f32)
    x_ext = x_ext.at[:, :, act_off:act_off + P].set(xp.reshape(N, C, P))

    # im2col weights: HWIO (dy, dx, ci, co) -> (co, dy, dx, ci) -> (C, 9C),
    # K ordered as (dy, dx, ci) to match the tap stacking inside the kernel.
    def repack(w):
        return jnp.transpose(w.astype(f32), (3, 0, 1, 2)).reshape(C, 9 * C)

    w1r, w2r, w3r = repack(w1), repack(w2), repack(w3)
    b1c = b1.astype(f32).reshape(C, 1)
    b2c = b2.astype(f32).reshape(C, 1)
    b3c = b3.astype(f32).reshape(C, 1)

    # Interior mask over flattened padded coordinates.
    p = jnp.arange(n_pos)
    pi, pj = p // Wp, p % Wp
    mask = ((p < P) & (pi >= 1) & (pi <= H) & (pj >= 1) & (pj <= W))
    mask = mask.astype(f32).reshape(1, n_pos)

    kernel = _make_rrdb_kernel(H, W, act_off, n_pos, ext_len, mxu_dtype)

    out_flat = pl.pallas_call(
        kernel,
        out_shape=jax.ShapeDtypeStruct((N, C, n_pos), f32),
        grid_spec=pltpu.PrefetchScalarGridSpec(
            num_scalar_prefetch=0,
            grid=(N,),
            in_specs=[
                pl.BlockSpec((1, C, ext_len), lambda n: (n, 0, 0)),
                pl.BlockSpec((C, 9 * C), lambda n: (0, 0)),
                pl.BlockSpec((C, 9 * C), lambda n: (0, 0)),
                pl.BlockSpec((C, 9 * C), lambda n: (0, 0)),
                pl.BlockSpec((C, 1), lambda n: (0, 0)),
                pl.BlockSpec((C, 1), lambda n: (0, 0)),
                pl.BlockSpec((C, 1), lambda n: (0, 0)),
                pl.BlockSpec((1, n_pos), lambda n: (0, 0)),
            ],
            out_specs=pl.BlockSpec((1, C, n_pos), lambda n: (n, 0, 0)),
            scratch_shapes=[pltpu.VMEM((C, ext_len), f32)],
        ),
        compiler_params=pltpu.CompilerParams(
            dimension_semantics=("parallel",)),
    )(x_ext, w1r, w2r, w3r, b1c, b2c, b3c, mask)

    # Extract the valid interior and reshape back to NCHW.
    out = out_flat[:, :, :P].reshape(N, C, Hp, Wp)[:, :, 1:H + 1, 1:W + 1]
    return out


def _reference_rrdb(x_nchw, w1, b1, w2, b2, w3, b3):
    """Pure-JAX reference using lax.conv (for correctness check)."""
    x = jnp.transpose(x_nchw, (0, 2, 3, 1))  # NHWC
    dn = ("NHWC", "HWIO", "NHWC")

    def conv(v, w, b):
        return jax.lax.conv_general_dilated(
            v, w, window_strides=(1, 1), padding="SAME",
            dimension_numbers=dn) + b

    out = jax.nn.leaky_relu(conv(x, w1, b1), 0.2)
    out = jax.nn.leaky_relu(conv(out, w2, b2), 0.2)
    out = conv(out, w3, b3)
    out = x + out
    return jnp.transpose(out, (0, 3, 1, 2))


if __name__ == "__main__":
    N, C, H, W = 2, 4, 16, 16

    key = jax.random.PRNGKey(0)
    kx, k1, k2, k3, kb1, kb2, kb3 = jax.random.split(key, 7)

    x = jax.random.normal(kx, (N, C, H, W), dtype=jnp.float32)

    # Synthetic parameters in HWIO layout (kH, kW, Cin, Cout).
    w1 = jax.random.normal(k1, (3, 3, C, C), dtype=jnp.float32) * 0.1
    w2 = jax.random.normal(k2, (3, 3, C, C), dtype=jnp.float32) * 0.1
    w3 = jax.random.normal(k3, (3, 3, C, C), dtype=jnp.float32) * 0.1
    b1 = jax.random.normal(kb1, (C,), dtype=jnp.float32) * 0.1
    b2 = jax.random.normal(kb2, (C,), dtype=jnp.float32) * 0.1
    b3 = jax.random.normal(kb3, (C,), dtype=jnp.float32) * 0.1

    out = rrdb_forward(x, w1, b1, w2, b2, w3, b3)
    out = jax.block_until_ready(out)

    ref = jax.block_until_ready(_reference_rrdb(x, w1, b1, w2, b2, w3, b3))
    assert out.shape == (N, C, H, W)
    assert jnp.allclose(out, ref, atol=1e-4, rtol=1e-4), "mismatch vs reference"

    print("KERNEL_OK")
</pallas_src>

<mosaic_0001>
module attributes {stable_mosaic.version = 11 : i64} {
  func.func @kernel(%arg0: i32, %arg1: memref<1x4x640xf32, #tpu.memory_space<vmem>>, %arg2: memref<4x36xf32, #tpu.memory_space<vmem>>, %arg3: memref<4x36xf32, #tpu.memory_space<vmem>>, %arg4: memref<4x36xf32, #tpu.memory_space<vmem>>, %arg5: memref<4x1xf32, #tpu.memory_space<vmem>>, %arg6: memref<4x1xf32, #tpu.memory_space<vmem>>, %arg7: memref<4x1xf32, #tpu.memory_space<vmem>>, %arg8: memref<1x384xf32, #tpu.memory_space<vmem>>, %arg9: memref<1x4x384xf32, #tpu.memory_space<vmem>>, %arg10: memref<4x640xf32, #tpu.memory_space<vmem>>) attributes {dimension_semantics = [#tpu.dimension_semantics<parallel>], iteration_bounds = array<i64: 2>, scalar_prefetch = 0 : i64, scratch_operands = 1 : i64, tpu.core_type = #tpu.core_type<tc>, window_params = [{transform_indices = @transform_0, window_bounds = array<i64: 1, 4, 640>}, {pipeline_mode = #tpu.pipeline_mode<synchronous>, transform_indices = @transform_1, window_bounds = array<i64: 4, 36>}, {pipeline_mode = #tpu.pipeline_mode<synchronous>, transform_indices = @transform_2, window_bounds = array<i64: 4, 36>}, {pipeline_mode = #tpu.pipeline_mode<synchronous>, transform_indices = @transform_3, window_bounds = array<i64: 4, 36>}, {pipeline_mode = #tpu.pipeline_mode<synchronous>, transform_indices = @transform_4, window_bounds = array<i64: 4, 1>}, {pipeline_mode = #tpu.pipeline_mode<synchronous>, transform_indices = @transform_5, window_bounds = array<i64: 4, 1>}, {pipeline_mode = #tpu.pipeline_mode<synchronous>, transform_indices = @transform_6, window_bounds = array<i64: 4, 1>}, {pipeline_mode = #tpu.pipeline_mode<synchronous>, transform_indices = @transform_7, window_bounds = array<i64: 1, 384>}, {transform_indices = @transform_8, window_bounds = array<i64: 1, 4, 384>}]} {
    %cst = arith.constant 0.000000e+00 : f32
    %0 = vector.broadcast %cst : f32 to vector<4x128xf32>
    %c0 = arith.constant 0 : index
    %c0_0 = arith.constant 0 : index
    %1 = vector.load %arg10[%c0, %c0_0] : memref<4x640xf32, #tpu.memory_space<vmem>>, vector<4x128xf32>
    tpu.vector_store %arg10[%c0, %c0_0], %0 {strides = array<i32>} : memref<4x640xf32, #tpu.memory_space<vmem>>, vector<4x128xf32>,
    %cst_1 = arith.constant 0.000000e+00 : f32
    %2 = vector.broadcast %cst_1 : f32 to vector<4x128xf32>
    %c0_2 = arith.constant 0 : index
    %c512 = arith.constant 512 : index
    %3 = vector.load %arg10[%c0_2, %c512] : memref<4x640xf32, #tpu.memory_space<vmem>>, vector<4x128xf32>
    tpu.vector_store %arg10[%c0_2, %c512], %2 {strides = array<i32>} : memref<4x640xf32, #tpu.memory_space<vmem>>, vector<4x128xf32>,
    %c0_3 = arith.constant 0 : index
    %c0_4 = arith.constant 0 : index
    %c0_5 = arith.constant 0 : index
    %4 = vector.load %arg1[%c0_3, %c0_4, %c0_5] : memref<1x4x640xf32, #tpu.memory_space<vmem>>, vector<1x4x640xf32>
    %5 = vector.shape_cast %4 : vector<1x4x640xf32> to vector<4x640xf32>
    %c0_6 = arith.constant 0 : index
    %c0_7 = arith.constant 0 : index
    %6 = vector.load %arg8[%c0_6, %c0_7] : memref<1x384xf32, #tpu.memory_space<vmem>>, vector<1x384xf32>
    %7 = vector.extract_strided_slice %5 {offsets = [0, 109], sizes = [4, 384], strides = [1, 1]} : vector<4x640xf32> to vector<4x384xf32>
    %8 = vector.extract_strided_slice %5 {offsets = [0, 110], sizes = [4, 384], strides = [1, 1]} : vector<4x640xf32> to vector<4x384xf32>
    %9 = vector.extract_strided_slice %5 {offsets = [0, 111], sizes = [4, 384], strides = [1, 1]} : vector<4x640xf32> to vector<4x384xf32>
    %10 = vector.extract_strided_slice %5 {offsets = [0, 127], sizes = [4, 384], strides = [1, 1]} : vector<4x640xf32> to vector<4x384xf32>
    %11 = vector.extract_strided_slice %5 {offsets = [0, 128], sizes = [4, 384], strides = [1, 1]} : vector<4x640xf32> to vector<4x384xf32>
    %12 = vector.extract_strided_slice %5 {offsets = [0, 129], sizes = [4, 384], strides = [1, 1]} : vector<4x640xf32> to vector<4x384xf32>
    %13 = vector.extract_strided_slice %5 {offsets = [0, 145], sizes = [4, 384], strides = [1, 1]} : vector<4x640xf32> to vector<4x384xf32>
    %14 = vector.extract_strided_slice %5 {offsets = [0, 146], sizes = [4, 384], strides = [1, 1]} : vector<4x640xf32> to vector<4x384xf32>
    %15 = vector.extract_strided_slice %5 {offsets = [0, 147], sizes = [4, 384], strides = [1, 1]} : vector<4x640xf32> to vector<4x384xf32>
    %16 = tpu.concatenate %7, %8, %9, %10, %11, %12, %13, %14, %15 in 0 : vector<4x384xf32>, vector<4x384xf32>, vector<4x384xf32>, vector<4x384xf32>, vector<4x384xf32>, vector<4x384xf32>, vector<4x384xf32>, vector<4x384xf32>, vector<4x384xf32> -> vector<36x384xf32>
    %c0_8 = arith.constant 0 : index
    %c0_9 = arith.constant 0 : index
    %17 = vector.load %arg2[%c0_8, %c0_9] : memref<4x36xf32, #tpu.memory_space<vmem>>, vector<4x36xf32>
    %cst_10 = arith.constant dense<0.000000e+00> : vector<4x384xf32>
    %18 = tpu.matmul %17, %16, %cst_10 {dimension_numbers = #tpu.dot_dimension_numbers<[1], [0], [0], [1], [0, 0, 1, 1], [], []>} : vector<4x36xf32>, vector<36x384xf32>, vector<4x384xf32> -> vector<4x384xf32>
    %c0_11 = arith.constant 0 : index
    %c0_12 = arith.constant 0 : index
    %19 = vector.load %arg5[%c0_11, %c0_12] : memref<4x1xf32, #tpu.memory_space<vmem>>, vector<4x1xf32>
    %20 = vector.broadcast %19 : vector<4x1xf32> to vector<4x384xf32>
    %21 = arith.addf %18, %20 : vector<4x384xf32>
    %cst_13 = arith.constant 0.000000e+00 : f32
    %22 = vector.broadcast %cst_13 : f32 to vector<4x384xf32>
    %23 = arith.cmpf ogt, %21, %22 : vector<4x384xf32>
    %cst_14 = arith.constant 2.000000e-01 : f32
    %24 = vector.broadcast %cst_14 : f32 to vector<4x384xf32>
    %25 = arith.mulf %24, %21 : vector<4x384xf32>
    %26 = arith.select %23, %21, %25 : vector<4x384xi1>, vector<4x384xf32>
    %27 = vector.broadcast %6 : vector<1x384xf32> to vector<4x384xf32>
    %28 = arith.mulf %26, %27 : vector<4x384xf32>
    %c0_15 = arith.constant 0 : index
    %c128 = arith.constant 128 : index
    %29 = vector.load %arg10[%c0_15, %c128] : memref<4x640xf32, #tpu.memory_space<vmem>>, vector<4x384xf32>
    tpu.vector_store %arg10[%c0_15, %c128], %28 {strides = array<i32>} : memref<4x640xf32, #tpu.memory_space<vmem>>, vector<4x384xf32>,
    %c0_16 = arith.constant 0 : index
    %c0_17 = arith.constant 0 : index
    %30 = vector.load %arg10[%c0_16, %c0_17] : memref<4x640xf32, #tpu.memory_space<vmem>>, vector<4x640xf32>
    %31 = vector.extract_strided_slice %30 {offsets = [0, 109], sizes = [4, 384], strides = [1, 1]} : vector<4x640xf32> to vector<4x384xf32>
    %32 = vector.extract_strided_slice %30 {offsets = [0, 110], sizes = [4, 384], strides = [1, 1]} : vector<4x640xf32> to vector<4x384xf32>
    %33 = vector.extract_strided_slice %30 {offsets = [0, 111], sizes = [4, 384], strides = [1, 1]} : vector<4x640xf32> to vector<4x384xf32>
    %34 = vector.extract_strided_slice %30 {offsets = [0, 127], sizes = [4, 384], strides = [1, 1]} : vector<4x640xf32> to vector<4x384xf32>
    %35 = vector.extract_strided_slice %30 {offsets = [0, 128], sizes = [4, 384], strides = [1, 1]} : vector<4x640xf32> to vector<4x384xf32>
    %36 = vector.extract_strided_slice %30 {offsets = [0, 129], sizes = [4, 384], strides = [1, 1]} : vector<4x640xf32> to vector<4x384xf32>
    %37 = vector.extract_strided_slice %30 {offsets = [0, 145], sizes = [4, 384], strides = [1, 1]} : vector<4x640xf32> to vector<4x384xf32>
    %38 = vector.extract_strided_slice %30 {offsets = [0, 146], sizes = [4, 384], strides = [1, 1]} : vector<4x640xf32> to vector<4x384xf32>
    %39 = vector.extract_strided_slice %30 {offsets = [0, 147], sizes = [4, 384], strides = [1, 1]} : vector<4x640xf32> to vector<4x384xf32>
    %40 = tpu.concatenate %31, %32, %33, %34, %35, %36, %37, %38, %39 in 0 : vector<4x384xf32>, vector<4x384xf32>, vector<4x384xf32>, vector<4x384xf32>, vector<4x384xf32>, vector<4x384xf32>, vector<4x384xf32>, vector<4x384xf32>, vector<4x384xf32> -> vector<36x384xf32>
    %c0_18 = arith.constant 0 : index
    %c0_19 = arith.constant 0 : index
    %41 = vector.load %arg3[%c0_18, %c0_19] : memref<4x36xf32, #tpu.memory_space<vmem>>, vector<4x36xf32>
    %cst_20 = arith.constant dense<0.000000e+00> : vector<4x384xf32>
    %42 = tpu.matmul %41, %40, %cst_20 {dimension_numbers = #tpu.dot_dimension_numbers<[1], [0], [0], [1], [0, 0, 1, 1], [], []>} : vector<4x36xf32>, vector<36x384xf32>, vector<4x384xf32> -> vector<4x384xf32>
    %c0_21 = arith.constant 0 : index
    %c0_22 = arith.constant 0 : index
    %43 = vector.load %arg6[%c0_21, %c0_22] : memref<4x1xf32, #tpu.memory_space<vmem>>, vector<4x1xf32>
    %44 = vector.broadcast %43 : vector<4x1xf32> to vector<4x384xf32>
    %45 = arith.addf %42, %44 : vector<4x384xf32>
    %cst_23 = arith.constant 0.000000e+00 : f32
    %46 = vector.broadcast %cst_23 : f32 to vector<4x384xf32>
    %47 = arith.cmpf ogt, %45, %46 : vector<4x384xf32>
    %cst_24 = arith.constant 2.000000e-01 : f32
    %48 = vector.broadcast %cst_24 : f32 to vector<4x384xf32>
    %49 = arith.mulf %48, %45 : vector<4x384xf32>
    %50 = arith.select %47, %45, %49 : vector<4x384xi1>, vector<4x384xf32>
    %51 = vector.broadcast %6 : vector<1x384xf32> to vector<4x384xf32>
    %52 = arith.mulf %50, %51 : vector<4x384xf32>
    %c0_25 = arith.constant 0 : index
    %c128_26 = arith.constant 128 : index
    %53 = vector.load %arg10[%c0_25, %c128_26] : memref<4x640xf32, #tpu.memory_space<vmem>>, vector<4x384xf32>
    tpu.vector_store %arg10[%c0_25, %c128_26], %52 {strides = array<i32>} : memref<4x640xf32, #tpu.memory_space<vmem>>, vector<4x384xf32>,
    %c0_27 = arith.constant 0 : index
    %c0_28 = arith.constant 0 : index
    %54 = vector.load %arg10[%c0_27, %c0_28] : memref<4x640xf32, #tpu.memory_space<vmem>>, vector<4x640xf32>
    %55 = vector.extract_strided_slice %54 {offsets = [0, 109], sizes = [4, 384], strides = [1, 1]} : vector<4x640xf32> to vector<4x384xf32>
    %56 = vector.extract_strided_slice %54 {offsets = [0, 110], sizes = [4, 384], strides = [1, 1]} : vector<4x640xf32> to vector<4x384xf32>
    %57 = vector.extract_strided_slice %54 {offsets = [0, 111], sizes = [4, 384], strides = [1, 1]} : vector<4x640xf32> to vector<4x384xf32>
    %58 = vector.extract_strided_slice %54 {offsets = [0, 127], sizes = [4, 384], strides = [1, 1]} : vector<4x640xf32> to vector<4x384xf32>
    %59 = vector.extract_strided_slice %54 {offsets = [0, 128], sizes = [4, 384], strides = [1, 1]} : vector<4x640xf32> to vector<4x384xf32>
    %60 = vector.extract_strided_slice %54 {offsets = [0, 129], sizes = [4, 384], strides = [1, 1]} : vector<4x640xf32> to vector<4x384xf32>
    %61 = vector.extract_strided_slice %54 {offsets = [0, 145], sizes = [4, 384], strides = [1, 1]} : vector<4x640xf32> to vector<4x384xf32>
    %62 = vector.extract_strided_slice %54 {offsets = [0, 146], sizes = [4, 384], strides = [1, 1]} : vector<4x640xf32> to vector<4x384xf32>
    %63 = vector.extract_strided_slice %54 {offsets = [0, 147], sizes = [4, 384], strides = [1, 1]} : vector<4x640xf32> to vector<4x384xf32>
    %64 = tpu.concatenate %55, %56, %57, %58, %59, %60, %61, %62, %63 in 0 : vector<4x384xf32>, vector<4x384xf32>, vector<4x384xf32>, vector<4x384xf32>, vector<4x384xf32>, vector<4x384xf32>, vector<4x384xf32>, vector<4x384xf32>, vector<4x384xf32> -> vector<36x384xf32>
    %c0_29 = arith.constant 0 : index
    %c0_30 = arith.constant 0 : index
    %65 = vector.load %arg4[%c0_29, %c0_30] : memref<4x36xf32, #tpu.memory_space<vmem>>, vector<4x36xf32>
    %cst_31 = arith.constant dense<0.000000e+00> : vector<4x384xf32>
    %66 = tpu.matmul %65, %64, %cst_31 {dimension_numbers = #tpu.dot_dimension_numbers<[1], [0], [0], [1], [0, 0, 1, 1], [], []>} : vector<4x36xf32>, vector<36x384xf32>, vector<4x384xf32> -> vector<4x384xf32>
    %c0_32 = arith.constant 0 : index
    %c0_33 = arith.constant 0 : index
    %67 = vector.load %arg7[%c0_32, %c0_33] : memref<4x1xf32, #tpu.memory_space<vmem>>, vector<4x1xf32>
    %68 = vector.broadcast %67 : vector<4x1xf32> to vector<4x384xf32>
    %69 = arith.addf %66, %68 : vector<4x384xf32>
    %70 = vector.extract_strided_slice %5 {offsets = [0, 128], sizes = [4, 384], strides = [1, 1]} : vector<4x640xf32> to vector<4x384xf32>
    %71 = arith.addf %70, %69 : vector<4x384xf32>
    %c0_34 = arith.constant 0 : index
    %c0_35 = arith.constant 0 : index
    %c0_36 = arith.constant 0 : index
    %72 = vector.load %arg9[%c0_34, %c0_35, %c0_36] : memref<1x4x384xf32, #tpu.memory_space<vmem>>, vector<1x4x384xf32>
    %73 = vector.shape_cast %72 : vector<1x4x384xf32> to vector<4x384xf32>
    %74 = vector.shape_cast %71 : vector<4x384xf32> to vector<1x4x384xf32>
    tpu.vector_store %arg9[%c0_34, %c0_35, %c0_36], %74 {strides = array<i32>} : memref<1x4x384xf32, #tpu.memory_space<vmem>>, vector<1x4x384xf32>,
    return
  }
  func.func @transform_0(%arg0: i32) -> (i32, i32, i32) {
    %c0_i32 = arith.constant 0 : i32
    %c0_i32_0 = arith.constant 0 : i32
    %c0_i32_1 = arith.constant 0 : i32
    return %arg0, %c0_i32, %c0_i32_0 : i32, i32, i32
  }
  func.func @transform_1(%arg0: i32) -> (i32, i32) {
    %c0_i32 = arith.constant 0 : i32
    %c0_i32_0 = arith.constant 0 : i32
    %c0_i32_1 = arith.constant 0 : i32
    return %c0_i32, %c0_i32_0 : i32, i32
  }
  func.func @transform_2(%arg0: i32) -> (i32, i32) {
    %c0_i32 = arith.constant 0 : i32
    %c0_i32_0 = arith.constant 0 : i32
    %c0_i32_1 = arith.constant 0 : i32
    return %c0_i32, %c0_i32_0 : i32, i32
  }
  func.func @transform_3(%arg0: i32) -> (i32, i32) {
    %c0_i32 = arith.constant 0 : i32
    %c0_i32_0 = arith.constant 0 : i32
    %c0_i32_1 = arith.constant 0 : i32
    return %c0_i32, %c0_i32_0 : i32, i32
  }
  func.func @transform_4(%arg0: i32) -> (i32, i32) {
    %c0_i32 = arith.constant 0 : i32
    %c0_i32_0 = arith.constant 0 : i32
    %c0_i32_1 = arith.constant 0 : i32
    return %c0_i32, %c0_i32_0 : i32, i32
  }
  func.func @transform_5(%arg0: i32) -> (i32, i32) {
    %c0_i32 = arith.constant 0 : i32
    %c0_i32_0 = arith.constant 0 : i32
    %c0_i32_1 = arith.constant 0 : i32
    return %c0_i32, %c0_i32_0 : i32, i32
  }
  func.func @transform_6(%arg0: i32) -> (i32, i32) {
    %c0_i32 = arith.constant 0 : i32
    %c0_i32_0 = arith.constant 0 : i32
    %c0_i32_1 = arith.constant 0 : i32
    return %c0_i32, %c0_i32_0 : i32, i32
  }
  func.func @transform_7(%arg0: i32) -> (i32, i32) {
    %c0_i32 = arith.constant 0 : i32
    %c0_i32_0 = arith.constant 0 : i32
    %c0_i32_1 = arith.constant 0 : i32
    return %c0_i32, %c0_i32_0 : i32, i32
  }
  func.func @transform_8(%arg0: i32) -> (i32, i32, i32) {
    %c0_i32 = arith.constant 0 : i32
    %c0_i32_0 = arith.constant 0 : i32
    %c0_i32_1 = arith.constant 0 : i32
    return %arg0, %c0_i32, %c0_i32_0 : i32, i32, i32
  }
}

</mosaic_0001>

<llo_original>
// kernel: tpu_custom_call.1
$region0: #{tpu_custom_call.1}
  #allocation0 [shape = 'u32[]', space=smem, size = 0x4, offset = 0x4, fixed_abs, tag = 'smem constant byte address 0x4 - core index']
  #allocation1 [shape = 'u32[144,128]{1,0:T(1,128)}', space=vmem, size = 0x12000, scoped, tag = 'internal scratch']
  #allocation2 [shape = 'f32[4,640]{1,0:T(4,128)}', space=vmem, size = 0x2800, scoped, tag = 'scratch operand']
  %s0 = inlined_call_operand.hbm [shape: f32[2,4,640], index: 0, kind: input, shape index: {}]
  %s1 = inlined_call_operand.vmem [shape: f32[4,36], index: 1, kind: input, shape index: {}]
  %s2 = inlined_call_operand.vmem [shape: f32[4,36], index: 2, kind: input, shape index: {}]
  %s3 = inlined_call_operand.vmem [shape: f32[4,36], index: 3, kind: input, shape index: {}]
  %s4 = inlined_call_operand.vmem [shape: f32[4,1], index: 4, kind: input, shape index: {}]
  %s5 = inlined_call_operand.vmem [shape: f32[4,1], index: 5, kind: input, shape index: {}]
  %s6 = inlined_call_operand.vmem [shape: f32[4,1], index: 6, kind: input, shape index: {}]
  %s7 = inlined_call_operand.vmem [shape: f32[1,384], index: 7, kind: input, shape index: {}]
  %s8 = inlined_call_operand.hbm [shape: f32[2,4,384], index: 8, kind: output, shape index: {}]
  %s9 = sld [smem:[#allocation0]]
  $region69: #{tpu_custom_call.1} parent=0
    _
  %s11 = ssub.s32 1, %s9
  %s12 = scalar_select 0, %s11, %s9
  $region1: #{tpu_custom_call.1} parent=0
    #allocation3 [shape = 'u8[20480]{0}', space=vmem, size = 0x5000, scoped, tag = 'input window, operand 0']
    #allocation4 [shape = 's32[2]{0}', space=sflag, size = 0x8, scoped, tag = 'scoped memory for tpu_custom_call.1']
    #allocation5 [shape = 's32[2]{0}', space=sflag, size = 0x8, scoped, tag = 'scoped memory for tpu_custom_call.1']
    #allocation6 [shape = 'u8[12288]{0}', space=vmem, size = 0x3000, scoped, tag = 'output window, operand 0']
    %13 = vsyncpa [#allocation4], 0
    %s14 = scalar_lea.sflag [#allocation4], 1
    %15 = vsyncpa %s14, 0
    %16 = vsyncpa [#allocation5], 0
    %s17 = scalar_lea.sflag [#allocation5], 1
    %18 = vsyncpa %s17, 0
    loop: start=0, step=1, limit=4
    $region2: #{tpu_custom_call.1} parent=1 // loop_pre_header
      _
    $region3: #{tpu_custom_call.1} parent=1 // loop_header
      %s20 = sphi 0, %s24
      %p21 = scmp.ge.s32.totalorder %s20, 4
      %s30 = sphi 0, %s32
      %s33 = sphi 0, %s30
      %s34 = sphi 0, %s33
      %s50 = sphi 0, %s34
      %s54 = sphi 0, %s54
      %s56 = sphi 0, %s54
      %s57 = sphi 0, %s56
      %s71 = sphi 0, %s57
      %s75 = sphi 0, %s75
      %s77 = sphi 0, %s75
      %s78 = sphi 0, %s77
      %s92 = sphi 0, %s78
      %s96 = sphi 0, %s96
      %s98 = sphi 0, %s96
      %s99 = sphi 0, %s98
      %s113 = sphi 0, %s99
      %s117 = sphi 0, %s117
      %s119 = sphi 0, %s117
      %s120 = sphi 0, %s119
      %s134 = sphi 0, %s120
      %s138 = sphi 0, %s138
      %s140 = sphi 0, %s138
      %s141 = sphi 0, %s140
      %s155 = sphi 0, %s141
      %s159 = sphi 0, %s159
      %s161 = sphi 0, %s159
      %s162 = sphi 0, %s161
      %s176 = sphi 0, %s162
      %s180 = sphi 0, %s180
      %s182 = sphi 0, %s180
      %s183 = sphi 0, %s182
      %s197 = sphi 0, %s183
      %s203 = sphi 0, %s205
      %s206 = sphi 0, %s203
      %s207 = sphi 0, %s206
      %s223 = sphi 0, %s207
    $region4: #{tpu_custom_call.1} parent=1 // loop_header_branch
      %23 = sbr.rel (%p21) target = $region8
    $region5: #{tpu_custom_call.1} parent=1 // loop_body
      %s25 = ssub.s32 %s20, 1
      %s26 = ssub.s32 %s20, 2
      %s27 = sadd.s32 %s20, 1
      %s28 = ssub.s32 %s20, %s27
      %p29 = scmp.eq.s32.totalorder %s28, 0
      %s31 = sadd.s32 %s30, 1
      %s32 = scalar_select %p29, %s30, %s31
      %p35 = pneg %p29
      %p36 = scmp.eq.s32.totalorder %s20, 1
      %p37 = por %p35, %p36
      %p38 = scmp.ne.s32.totalorder %s30, %s33
      %p39 = scmp.eq.s32.totalorder %s20, 0
      %p40 = por %p38, %p39
      %p41 = scmp.ne.s32.totalorder %s30, %s33
      %p42 = scmp.eq.s32.totalorder %s25, 1
      %p43 = por %p41, %p42
      %p44 = scmp.ne.s32.totalorder %s33, %s34
      %p45 = scmp.eq.s32.totalorder %s25, 0
      %p46 = por %p44, %p45
      %p47 = scmp.ne.s32.totalorder %s33, %s34
      %p48 = scmp.eq.s32.totalorder %s26, 1
      %p49 = por %p47, %p48
      %p51 = scmp.ne.s32.totalorder %s34, %s50
      %p52 = scmp.eq.s32.totalorder %s26, 0
      %p53 = por %p51, %p52
      %s55 = sadd.s32 %s54, 1
      %p58 = scmp.eq.s32.totalorder %s20, 1
      %p59 = scmp.ne.s32.totalorder %s54, %s56
      %p60 = scmp.eq.s32.totalorder %s20, 0
      %p61 = por %p59, %p60
      %p62 = scmp.ne.s32.totalorder %s54, %s56
      %p63 = scmp.eq.s32.totalorder %s25, 1
      %p64 = por %p62, %p63
      %p65 = scmp.ne.s32.totalorder %s56, %s57
      %p66 = scmp.eq.s32.totalorder %s25, 0
      %p67 = por %p65, %p66
      %p68 = scmp.ne.s32.totalorder %s56, %s57
      %p69 = scmp.eq.s32.totalorder %s26, 1
      %p70 = por %p68, %p69
      %p72 = scmp.ne.s32.totalorder %s57, %s71
      %p73 = scmp.eq.s32.totalorder %s26, 0
      %p74 = por %p72, %p73
      %s76 = sadd.s32 %s75, 1
      %p79 = scmp.eq.s32.totalorder %s20, 1
      %p80 = scmp.ne.s32.totalorder %s75, %s77
      %p81 = scmp.eq.s32.totalorder %s20, 0
      %p82 = por %p80, %p81
      %p83 = scmp.ne.s32.totalorder %s75, %s77
      %p84 = scmp.eq.s32.totalorder %s25, 1
      %p85 = por %p83, %p84
      %p86 = scmp.ne.s32.totalorder %s77, %s78
      %p87 = scmp.eq.s32.totalorder %s25, 0
      %p88 = por %p86, %p87
      %p89 = scmp.ne.s32.totalorder %s77, %s78
      %p90 = scmp.eq.s32.totalorder %s26, 1
      %p91 = por %p89, %p90
      %p93 = scmp.ne.s32.totalorder %s78, %s92
      %p94 = scmp.eq.s32.totalorder %s26, 0
      %p95 = por %p93, %p94
      %s97 = sadd.s32 %s96, 1
      %p100 = scmp.eq.s32.totalorder %s20, 1
      %p101 = scmp.ne.s32.totalorder %s96, %s98
      %p102 = scmp.eq.s32.totalorder %s20, 0
      %p103 = por %p101, %p102
      %p104 = scmp.ne.s32.totalorder %s96, %s98
      %p105 = scmp.eq.s32.totalorder %s25, 1
      %p106 = por %p104, %p105
      %p107 = scmp.ne.s32.totalorder %s98, %s99
      %p108 = scmp.eq.s32.totalorder %s25, 0
      %p109 = por %p107, %p108
      %p110 = scmp.ne.s32.totalorder %s98, %s99
      %p111 = scmp.eq.s32.totalorder %s26, 1
      %p112 = por %p110, %p111
      %p114 = scmp.ne.s32.totalorder %s99, %s113
      %p115 = scmp.eq.s32.totalorder %s26, 0
      %p116 = por %p114, %p115
      %s118 = sadd.s32 %s117, 1
      %p121 = scmp.eq.s32.totalorder %s20, 1
      %p122 = scmp.ne.s32.totalorder %s117, %s119
      %p123 = scmp.eq.s32.totalorder %s20, 0
      %p124 = por %p122, %p123
      %p125 = scmp.ne.s32.totalorder %s117, %s119
      %p126 = scmp.eq.s32.totalorder %s25, 1
      %p127 = por %p125, %p126
      %p128 = scmp.ne.s32.totalorder %s119, %s120
      %p129 = scmp.eq.s32.totalorder %s25, 0
      %p130 = por %p128, %p129
      %p131 = scmp.ne.s32.totalorder %s119, %s120
      %p132 = scmp.eq.s32.totalorder %s26, 1
      %p133 = por %p131, %p132
      %p135 = scmp.ne.s32.totalorder %s120, %s134
      %p136 = scmp.eq.s32.totalorder %s26, 0
      %p137 = por %p135, %p136
      %s139 = sadd.s32 %s138, 1
      %p142 = scmp.eq.s32.totalorder %s20, 1
      %p143 = scmp.ne.s32.totalorder %s138, %s140
      %p144 = scmp.eq.s32.totalorder %s20, 0
      %p145 = por %p143, %p144
      %p146 = scmp.ne.s32.totalorder %s138, %s140
      %p147 = scmp.eq.s32.totalorder %s25, 1
      %p148 = por %p146, %p147
      %p149 = scmp.ne.s32.totalorder %s140, %s141
      %p150 = scmp.eq.s32.totalorder %s25, 0
      %p151 = por %p149, %p150
      %p152 = scmp.ne.s32.totalorder %s140, %s141
      %p153 = scmp.eq.s32.totalorder %s26, 1
      %p154 = por %p152, %p153
      %p156 = scmp.ne.s32.totalorder %s141, %s155
      %p157 = scmp.eq.s32.totalorder %s26, 0
      %p158 = por %p156, %p157
      %s160 = sadd.s32 %s159, 1
      %p163 = scmp.eq.s32.totalorder %s20, 1
      %p164 = scmp.ne.s32.totalorder %s159, %s161
      %p165 = scmp.eq.s32.totalorder %s20, 0
      %p166 = por %p164, %p165
      %p167 = scmp.ne.s32.totalorder %s159, %s161
      %p168 = scmp.eq.s32.totalorder %s25, 1
      %p169 = por %p167, %p168
      %p170 = scmp.ne.s32.totalorder %s161, %s162
      %p171 = scmp.eq.s32.totalorder %s25, 0
      %p172 = por %p170, %p171
      %p173 = scmp.ne.s32.totalorder %s161, %s162
      %p174 = scmp.eq.s32.totalorder %s26, 1
      %p175 = por %p173, %p174
      %p177 = scmp.ne.s32.totalorder %s162, %s176
      %p178 = scmp.eq.s32.totalorder %s26, 0
      %p179 = por %p177, %p178
      %s181 = sadd.s32 %s180, 1
      %p184 = scmp.eq.s32.totalorder %s20, 1
      %p185 = scmp.ne.s32.totalorder %s180, %s182
      %p186 = scmp.eq.s32.totalorder %s20, 0
      %p187 = por %p185, %p186
      %p188 = scmp.ne.s32.totalorder %s180, %s182
      %p189 = scmp.eq.s32.totalorder %s25, 1
      %p190 = por %p188, %p189
      %p191 = scmp.ne.s32.totalorder %s182, %s183
      %p192 = scmp.eq.s32.totalorder %s25, 0
      %p193 = por %p191, %p192
      %p194 = scmp.ne.s32.totalorder %s182, %s183
      %p195 = scmp.eq.s32.totalorder %s26, 1
      %p196 = por %p194, %p195
      %p198 = scmp.ne.s32.totalorder %s183, %s197
      %p199 = scmp.eq.s32.totalorder %s26, 0
      %p200 = por %p198, %p199
      %s201 = ssub.s32 %s20, %s27
      %p202 = scmp.eq.s32.totalorder %s201, 0
      %s204 = sadd.s32 %s203, 1
      %s205 = scalar_select %p202, %s203, %s204
      %p208 = pneg %p202
      %p209 = scmp.eq.s32.totalorder %s20, 1
      %p210 = por %p208, %p209
      %p211 = scmp.ne.s32.totalorder %s203, %s206
      %p212 = scmp.eq.s32.totalorder %s20, 0
      %p213 = por %p211, %p212
      %p214 = scmp.ne.s32.totalorder %s203, %s206
      %p215 = scmp.eq.s32.totalorder %s25, 1
      %p216 = por %p214, %p215
      %p217 = scmp.ne.s32.totalorder %s206, %s207
      %p218 = scmp.eq.s32.totalorder %s25, 0
      %p219 = por %p217, %p218
      %p220 = scmp.ne.s32.totalorder %s206, %s207
      %p221 = scmp.eq.s32.totalorder %s26, 1
      %p222 = por %p220, %p221
      %p224 = scmp.ne.s32.totalorder %s207, %s223
      %p225 = scmp.eq.s32.totalorder %s26, 0
      %p226 = por %p224, %p225
      %p227 = scmp.le.s32.totalorder 1, %s20
      %p228 = scmp.lt.s32.totalorder %s20, 3
      %p229 = pnand %p227, %p228
      %p230 = pneg %p229
      // Predicated region
      $region9: #{tpu_custom_call.1} parent=5 // pred_check
        _
      $region10: #{tpu_custom_call.1} parent=5 // pred_check_branch
        %232 = sbr.rel (%p229) target = $region12
      $region11: #{tpu_custom_call.1} parent=5 // pred_region
        %s233 = ssub.s32 %s20, 1
        // Predicated region
        $region13: #{tpu_custom_call.1} parent=11 // pred_check
          %p234 = pneg %p67
        $region14: #{tpu_custom_call.1} parent=11 // pred_check_branch
          %236 = sbr.rel (%p234) target = $region16
        $region15: #{tpu_custom_call.1} parent=11 // pred_region
          _
        $region16: #{tpu_custom_call.1} parent=11 // pred_fallthru
          _
        // Predicated region
        $region17: #{tpu_custom_call.1} parent=11 // pred_check
          %p237 = pneg %p88
        $region18: #{tpu_custom_call.1} parent=11 // pred_check_branch
          %239 = sbr.rel (%p237) target = $region20
        $region19: #{tpu_custom_call.1} parent=11 // pred_region
          _
        $region20: #{tpu_custom_call.1} parent=11 // pred_fallthru
          _
        // Predicated region
        $region21: #{tpu_custom_call.1} parent=11 // pred_check
          %p240 = pneg %p109
        $region22: #{tpu_custom_call.1} parent=11 // pred_check_branch
          %242 = sbr.rel (%p240) target = $region24
        $region23: #{tpu_custom_call.1} parent=11 // pred_region
          _
        $region24: #{tpu_custom_call.1} parent=11 // pred_fallthru
          _
        // Predicated region
        $region25: #{tpu_custom_call.1} parent=11 // pred_check
          %p243 = pneg %p130
        $region26: #{tpu_custom_call.1} parent=11 // pred_check_branch
          %245 = sbr.rel (%p243) target = $region28
        $region27: #{tpu_custom_call.1} parent=11 // pred_region
          _
        $region28: #{tpu_custom_call.1} parent=11 // pred_fallthru
          _
        // Predicated region
        $region29: #{tpu_custom_call.1} parent=11 // pred_check
          %p246 = pneg %p151
        $region30: #{tpu_custom_call.1} parent=11 // pred_check_branch
          %248 = sbr.rel (%p246) target = $region32
        $region31: #{tpu_custom_call.1} parent=11 // pred_region
          _
        $region32: #{tpu_custom_call.1} parent=11 // pred_fallthru
          _
        // Predicated region
        $region33: #{tpu_custom_call.1} parent=11 // pred_check
          %p249 = pneg %p172
        $region34: #{tpu_custom_call.1} parent=11 // pred_check_branch
          %251 = sbr.rel (%p249) target = $region36
        $region35: #{tpu_custom_call.1} parent=11 // pred_region
          _
        $region36: #{tpu_custom_call.1} parent=11 // pred_fallthru
          _
        // Predicated region
        $region37: #{tpu_custom_call.1} parent=11 // pred_check
          %p252 = pneg %p193
        $region38: #{tpu_custom_call.1} parent=11 // pred_check_branch
          %254 = sbr.rel (%p252) target = $region40
        $region39: #{tpu_custom_call.1} parent=11 // pred_region
          _
        $region40: #{tpu_custom_call.1} parent=11 // pred_fallthru
          _
      $region12: #{tpu_custom_call.1} parent=5 // pred_fallthru
        _
      %p255 = scmp.lt.s32.totalorder %s20, 2
      // Predicated region
      $region41: #{tpu_custom_call.1} parent=5 // pred_check
        %p256 = pneg %p255
      $region42: #{tpu_custom_call.1} parent=5 // pred_check_branch
        %258 = sbr.rel (%p256) target = $region44
      $region43: #{tpu_custom_call.1} parent=5 // pred_region
        // Predicated region
        $region45: #{tpu_custom_call.1} parent=43 // pred_check
          %p259 = pneg %p40
        $region46: #{tpu_custom_call.1} parent=43 // pred_check_branch
          %261 = sbr.rel (%p259) target = $region48
        $region47: #{tpu_custom_call.1} parent=43 // pred_region
          %s262 = sand.u32 %s30, 1
          %s263 = scalar_lea.sflag [#allocation4], %s262
          %s264 = sand.u32 %s30, 1
          %s265 = smul.addr %s264, 20
          %s266 = scalar_lea.vmem [#allocation3], %s265
          %s268 = ssub.s32 320, 320
          %269 = vsyncadd %s263, %s268
          %s270 = smul.addr %s20, 5
          %s271 = smul.addr %s270, 64
          %s272 = scalar_lea.hbm %s0, %s271
          %s274 = sshll.u32 %s266, 4
          %s275 = int_to_ptr.vmem [resolvable:$true] %s274
          %277 = dma.hbm_to_vmem [thread:$0]  %s272, 320, %s275, %s263
        $region48: #{tpu_custom_call.1} parent=43 // pred_fallthru
          _
      $region44: #{tpu_custom_call.1} parent=5 // pred_fallthru
        _
      %p278 = scmp.le.s32.totalorder 1, %s20
      %p279 = scmp.lt.s32.totalorder %s20, 3
      %p280 = pnand %p278, %p279
      %p281 = pneg %p280
      // Predicated region
      $region49: #{tpu_custom_call.1} parent=5 // pred_check
        _
      $region50: #{tpu_custom_call.1} parent=5 // pred_check_branch
        %283 = sbr.rel (%p280) target = $region52
      $region51: #{tpu_custom_call.1} parent=5 // pred_region
        %s284 = ssub.s32 %s20, 1
        %s285 = sand.u32 %s33, 1
        %s286 = scalar_lea.sflag [#allocation4], %s285
        %s287 = sand.u32 %s33, 1
        %s288 = smul.addr %s287, 20
        %s289 = scalar_lea.vmem [#allocation3], %s288
        // Predicated region
        $region53: #{tpu_custom_call.1} parent=51 // pred_check
          %p290 = pneg %p46
        $region54: #{tpu_custom_call.1} parent=51 // pred_check_branch
          %292 = sbr.rel (%p290) target = $region56
        $region55: #{tpu_custom_call.1} parent=51 // pred_region
          %293 = dma.done %s286, 320
        $region56: #{tpu_custom_call.1} parent=51 // pred_fallthru
          _
        %s294 = sand.u32 %s33, 1
        %s295 = scalar_lea.sflag [#allocation4], %s294
        %s296 = sand.u32 %s33, 1
        %s297 = smul.addr %s296, 20
        %s298 = scalar_lea.vmem [#allocation3], %s297
        %p299 = pneg %p46
        %p300 = pneg %p43
        %p301 = pneg %p67
        %p302 = pneg %p64
        %p303 = pneg %p88
        %p304 = pneg %p85
        %p305 = pneg %p109
        %p306 = pneg %p106
        %p307 = pneg %p130
        %p308 = pneg %p127
        %p309 = pneg %p151
        %p310 = pneg %p148
        %p311 = pneg %p172
        %p312 = pneg %p169
        %p313 = pneg %p193
        %p314 = pneg %p190
        %p315 = pneg %p219
        %p316 = pneg %p216
        %s317 = sand.u32 %s206, 1
        %s318 = scalar_lea.sflag [#allocation5], %s317
        %s319 = sand.u32 %s206, 1
        %s320 = smul.addr %s319, 12
        %s321 = scalar_lea.vmem [#allocation6], %s320
        %322 = vst [vmem:[#allocation2] sm:$0xf] 0.0
        %323 = vst [vmem:[#allocation2 + $0x10] sm:$0xf] 0.0
        %v324 = vld [vmem:[%s289] sm:$0xff]
        %v325 = vld [vmem:[%s289 + $0x8] sm:$0xff]
        %v326 = vld [vmem:[%s289 + $0x10] sm:$0xf]
        %v327 = vld [vmem:[%s7] sm:$0x7]
        %v330 = vcombine.high %v324, %v324
        %v331 = vcombine.high %v325, %v325
        %v334 = vcombine.low %v324, %v324
        %v335 = vcombine.low %v325, %v325
        %336 = vrot.lane.b32.xlu0 %v334, 127
        %v337 = vpop.permute.xlu0 %336
        %338 = vrot.lane.b32.xlu0 %v324, 127
        %v339 = vpop.permute.xlu0 %338
        %340 = vrot.lane.b32.xlu0 %v335, 127
        %v341 = vpop.permute.xlu0 %340
        %342 = vrot.lane.b32.xlu0 %v325, 127
        %v343 = vpop.permute.xlu0 %342
        %vm344 = vcmask 1039360
        %v345 = vsel %vm344, %v337, %v339
        %v346 = vsel %vm344, %v339, %v341
        %v347 = vsel %vm344, %v341, %v343
        %352 = vrot.lane.b32.xlu0 %v324, 126
        %v353 = vpop.permute.xlu0 %352
        %354 = vrot.lane.b32.xlu0 %v330, 126
        %v355 = vpop.permute.xlu0 %354
        %356 = vrot.lane.b32.xlu0 %v325, 126
        %v357 = vpop.permute.xlu0 %356
        %358 = vrot.lane.b32.xlu0 %v331, 126
        %v359 = vpop.permute.xlu0 %358
        %vm360 = vcmask 1031168
        %v361 = vsel %vm360, %v353, %v355
        %v362 = vsel %vm360, %v355, %v357
        %v363 = vsel %vm360, %v357, %v359
        %368 = vrot.lane.b32.xlu0 %v334, 110
        %v369 = vpop.permute.xlu0 %368
        %370 = vrot.lane.b32.xlu0 %v324, 110
        %v371 = vpop.permute.xlu0 %370
        %372 = vrot.lane.b32.xlu0 %v335, 110
        %v373 = vpop.permute.xlu0 %372
        %374 = vrot.lane.b32.xlu0 %v325, 110
        %v375 = vpop.permute.xlu0 %374
        %vm376 = vcmask 900096
        %v377 = vsel %vm376, %v369, %v371
        %v378 = vsel %vm376, %v371, %v373
        %v379 = vsel %vm376, %v373, %v375
        %384 = vrot.lane.b32.xlu0 %v330, 109
        %v385 = vpop.permute.xlu0 %384
        %386 = vrot.lane.b32.xlu0 %v325, 109
        %v387 = vpop.permute.xlu0 %386
        %388 = vrot.lane.b32.xlu0 %v331, 109
        %v389 = vpop.permute.xlu0 %388
        %vm390 = vcmask 891904
        %v391 = vsel %vm390, %v385, %v387
        %v392 = vsel %vm390, %v387, %v389
        %v398 = vcombine.low %v326, %v326
        %399 = vrot.lane.b32.xlu0 %v324, 108
        %v400 = vpop.permute.xlu0 %399
        %401 = vrot.lane.b32.xlu0 %v335, 108
        %v402 = vpop.permute.xlu0 %401
        %403 = vrot.lane.b32.xlu0 %v325, 108
        %v404 = vpop.permute.xlu0 %403
        %405 = vrot.lane.b32.xlu0 %v398, 108
        %v406 = vpop.permute.xlu0 %405
        %vm407 = vcmask 883712
        %v408 = vsel %vm407, %v400, %v402
        %v409 = vsel %vm407, %v402, %v404
        %v410 = vsel %vm407, %v404, %v406
        %415 = vrot.lane.b32.xlu0 %v330, 92
        %v416 = vpop.permute.xlu0 %415
        %417 = vrot.lane.b32.xlu0 %v325, 92
        %v418 = vpop.permute.xlu0 %417
        %419 = vrot.lane.b32.xlu0 %v331, 92
        %v420 = vpop.permute.xlu0 %419
        %421 = vrot.lane.b32.xlu0 %v326, 92
        %v422 = vpop.permute.xlu0 %421
        %vm423 = vcmask 752640
        %v424 = vsel %vm423, %v416, %v418
        %v425 = vsel %vm423, %v418, %v420
        %v426 = vsel %vm423, %v420, %v422
        %431 = vrot.lane.b32.xlu0 %v324, 91
        %v432 = vpop.permute.xlu0 %431
        %433 = vrot.lane.b32.xlu0 %v335, 91
        %v434 = vpop.permute.xlu0 %433
        %435 = vrot.lane.b32.xlu0 %v325, 91
        %v436 = vpop.permute.xlu0 %435
        %437 = vrot.lane.b32.xlu0 %v398, 91
        %v438 = vpop.permute.xlu0 %437
        %vm439 = vcmask 744448
        %v440 = vsel %vm439, %v432, %v434
        %v441 = vsel %vm439, %v434, %v436
        %v442 = vsel %vm439, %v436, %v438
        %447 = vrot.lane.b32.xlu0 %v330, 90
        %v448 = vpop.permute.xlu0 %447
        %449 = vrot.lane.b32.xlu0 %v325, 90
        %v450 = vpop.permute.xlu0 %449
        %451 = vrot.lane.b32.xlu0 %v331, 90
        %v452 = vpop.permute.xlu0 %451
        %453 = vrot.lane.b32.xlu0 %v326, 90
        %v454 = vpop.permute.xlu0 %453
        %vm455 = vcmask 736256
        %v456 = vsel %vm455, %v448, %v450
        %v457 = vsel %vm455, %v450, %v452
        %v458 = vsel %vm455, %v452, %v454
        %vm459 = vcmask 1043456
        %v460 = vsel %vm459, %v324, %v345
        %v461 = vsel %vm459, %v330, %v346
        %v462 = vsel %vm459, %v325, %v347
        %v463 = vsel %vm459, %v331, %v343
        %v464 = vsel %vm459, %v361, %v377
        %v465 = vsel %vm459, %v362, %v378
        %v466 = vsel %vm459, %v363, %v379
        %v467 = vsel %vm459, %v359, %v375
        %v468 = vsel %vm459, %v385, %v400
        %v469 = vsel %vm459, %v391, %v408
        %v470 = vsel %vm459, %v392, %v409
        %v471 = vsel %vm459, %v389, %v410
        %v472 = vsel %vm459, %v416, %v432
        %v473 = vsel %vm459, %v424, %v440
        %v474 = vsel %vm459, %v425, %v441
        %v475 = vsel %vm459, %v426, %v442
        %v476 = vld [vmem:[%s1] sm:$0xf]
        %v477 = vld [vmem:[%s4] sm:$0xf]
        %479 = vset.pattern.permute.xlu0 0
        %480 = vperm.xlu0 %479, %v477
        %v481 = vpop.permute.xlu0 %480
        %499 = vrot.lane.b32.xlu0 %v460, 19
        %v500 = vpop.permute.xlu0 %499
        %501 = vrot.lane.b32.xlu0 %v461, 19
        %v502 = vpop.permute.xlu0 %501
        %503 = vrot.lane.b32.xlu0 %v462, 19
        %v504 = vpop.permute.xlu0 %503
        %505 = vrot.lane.b32.xlu0 %v463, 19
        %v506 = vpop.permute.xlu0 %505
        %507 = vrot.lane.b32.xlu0 %v464, 19
        %v508 = vpop.permute.xlu0 %507
        %509 = vrot.lane.b32.xlu0 %v465, 19
        %v510 = vpop.permute.xlu0 %509
        %511 = vrot.lane.b32.xlu0 %v466, 19
        %v512 = vpop.permute.xlu0 %511
        %513 = vrot.lane.b32.xlu0 %v467, 19
        %v514 = vpop.permute.xlu0 %513
        %515 = vrot.lane.b32.xlu0 %v468, 19
        %v516 = vpop.permute.xlu0 %515
        %517 = vrot.lane.b32.xlu0 %v469, 19
        %v518 = vpop.permute.xlu0 %517
        %519 = vrot.lane.b32.xlu0 %v470, 19
        %v520 = vpop.permute.xlu0 %519
        %521 = vrot.lane.b32.xlu0 %v471, 19
        %v522 = vpop.permute.xlu0 %521
        %523 = vrot.lane.b32.xlu0 %v472, 19
        %v524 = vpop.permute.xlu0 %523
        %525 = vrot.lane.b32.xlu0 %v473, 19
        %v526 = vpop.permute.xlu0 %525
        %527 = vrot.lane.b32.xlu0 %v474, 19
        %v528 = vpop.permute.xlu0 %527
        %529 = vrot.lane.b32.xlu0 %v475, 19
        %v530 = vpop.permute.xlu0 %529
        %531 = vrot.lane.b32.xlu0 %v448, 19
        %v532 = vpop.permute.xlu0 %531
        %533 = vrot.lane.b32.xlu0 %v456, 19
        %v534 = vpop.permute.xlu0 %533
        %535 = vrot.lane.b32.xlu0 %v457, 19
        %v536 = vpop.permute.xlu0 %535
        %537 = vrot.lane.b32.xlu0 %v458, 19
        %v538 = vpop.permute.xlu0 %537
        %vm539 = vcmask 154624
        %v540 = vsel %vm539, %v500, %v502
        %v541 = vsel %vm539, %v502, %v504
        %v542 = vsel %vm539, %v504, %v506
        %v543 = vsel %vm539, %v508, %v510
        %v544 = vsel %vm539, %v510, %v512
        %v545 = vsel %vm539, %v512, %v514
        %v546 = vsel %vm539, %v516, %v518
        %v547 = vsel %vm539, %v518, %v520
        %v548 = vsel %vm539, %v520, %v522
        %v549 = vsel %vm539, %v524, %v526
        %v550 = vsel %vm539, %v526, %v528
        %v551 = vsel %vm539, %v528, %v530
        %v552 = vsel %vm539, %v532, %v534
        %v553 = vsel %vm539, %v534, %v536
        %v554 = vsel %vm539, %v536, %v538
        %vm567 = vcmask 293888
        %v569 = vsel %vm567, %v476, 0
        %v571 = vsel %vm459, %v552, 0
        %v573 = vsel %vm459, %v553, 0
        %v575 = vsel %vm459, %v554, 0
        %577 = vmatprep.subr.mxu0 0.0
        %578 = vmatpush1.msra.mxu0 0.0
        %579 = vmatprep.subr.mxu0 0.0
        %580 = vmatpush1.msra.mxu0 0.0
        %581 = vmatprep.subr.mxu0 0.0
        %582 = vmatpush1.msra.mxu0 0.0
        %583 = vmatprep.subr.mxu0 0.0
        %584 = vmatpush1.msra.mxu0 0.0
        %585 = vmatprep.subr.mxu0 0.0
        %586 = vmatpush1.msra.mxu0 0.0
        %587 = vmatprep.subr.mxu0 0.0
        %588 = vmatpush1.msra.mxu0 0.0
        %589 = vmatprep.subr.mxu0 0.0
        %590 = vmatpush1.msra.mxu0 0.0
        %591 = vmatprep.subr.mxu0 0.0
        %592 = vmatpush1.msra.mxu0 0.0
        %593 = vmatprep.subr.mxu0 0.0
        %594 = vmatpush1.msra.mxu0 0.0
        %595 = vmatprep.subr.mxu0 0.0
        %596 = vmatpush1.msra.mxu0 0.0
        %597 = vmatprep.subr.mxu0 0.0
        %598 = vmatpush1.msra.mxu0 0.0
        %599 = vmatprep.subr.mxu0 %v573
        %600 = vmatpush1.msra.mxu0 %v571
        %601 = vmatprep.subr.mxu0 %v550
        %602 = vmatpush1.msra.mxu0 %v549
        %603 = vmatprep.subr.mxu0 %v547
        %604 = vmatpush1.msra.mxu0 %v546
        %605 = vmatprep.subr.mxu0 %v544
        %606 = vmatpush1.msra.mxu0 %v543
        %607 = vmatprep.subr.mxu0 %v541
        %608 = vmatpush1.msra.mxu0 %v540
        %609 = vmatprep.subr.mxu0 0.0
        %610 = vmatpush2.msra.mxu0 0.0
        %611 = vmatprep.subr.mxu0 0.0
        %612 = vmatpush2.msra.mxu0 0.0
        %613 = vmatprep.subr.mxu0 0.0
        %614 = vmatpush2.msra.mxu0 0.0
        %615 = vmatprep.subr.mxu0 0.0
        %616 = vmatpush2.msra.mxu0 0.0
        %617 = vmatprep.subr.mxu0 0.0
        %618 = vmatpush2.msra.mxu0 0.0
        %619 = vmatprep.subr.mxu0 0.0
        %620 = vmatpush2.msra.mxu0 0.0
        %621 = vmatprep.subr.mxu0 0.0
        %622 = vmatpush2.msra.mxu0 0.0
        %623 = vmatprep.subr.mxu0 0.0
        %624 = vmatpush2.msra.mxu0 0.0
        %625 = vmatprep.subr.mxu0 0.0
        %626 = vmatpush2.msra.mxu0 0.0
        %627 = vmatprep.subr.mxu0 0.0
        %628 = vmatpush2.msra.mxu0 0.0
        %629 = vmatprep.subr.mxu0 0.0
        %630 = vmatpush2.msra.mxu0 0.0
        %631 = vmatprep.subr.mxu0 0.0
        %632 = vmatpush2.msra.mxu0 0.0
        %633 = vmatprep.subr.mxu0 0.0
        %634 = vmatpush2.msra.mxu0 0.0
        %635 = vmatprep.subr.mxu0 0.0
        %636 = vmatpush2.msra.mxu0 0.0
        %637 = vmatprep.subr.mxu0 0.0
        %638 = vmatpush2.msra.mxu0 0.0
        %639 = vmatprep.subr.mxu0 0.0
        %640 = vmatpush2.msra.mxu0 0.0
        %641 = vmatprep.mubr.f32.mxu0 0.0
        %642 = vmatmul.mubr.f32.gmra.mxu0 %v569
        %v643 = vpop.f32.mrf.mxu0
        %v644 = vadd.f32 %v481, %v643
        %v645 = vpop.f32.mrf.mxu0
        %v646 = vadd.f32 %v481, %v645
        %647 = vdwg.mxu0
        %648 = vmatprep.subr.mxu0 0.0
        %649 = vmatpush1.msra.mxu0 0.0
        %650 = vmatprep.subr.mxu0 0.0
        %651 = vmatpush1.msra.mxu0 0.0
        %652 = vmatprep.subr.mxu0 0.0
        %653 = vmatpush1.msra.mxu0 0.0
        %654 = vmatprep.subr.mxu0 0.0
        %655 = vmatpush1.msra.mxu0 0.0
        %656 = vmatprep.subr.mxu0 0.0
        %657 = vmatpush1.msra.mxu0 0.0
        %658 = vmatprep.subr.mxu0 0.0
        %659 = vmatpush1.msra.mxu0 0.0
        %660 = vmatprep.subr.mxu0 0.0
        %661 = vmatpush1.msra.mxu0 0.0
        %662 = vmatprep.subr.mxu0 0.0
        %663 = vmatpush1.msra.mxu0 0.0
        %664 = vmatprep.subr.mxu0 0.0
        %665 = vmatpush1.msra.mxu0 0.0
        %666 = vmatprep.subr.mxu0 0.0
        %667 = vmatpush1.msra.mxu0 0.0
        %668 = vmatprep.subr.mxu0 0.0
        %669 = vmatpush1.msra.mxu0 0.0
        %670 = vmatprep.subr.mxu0 0.0
        %671 = vmatpush1.msra.mxu0 %v575
        %672 = vmatprep.subr.mxu0 0.0
        %673 = vmatpush1.msra.mxu0 %v551
        %674 = vmatprep.subr.mxu0 0.0
        %675 = vmatpush1.msra.mxu0 %v548
        %676 = vmatprep.subr.mxu0 0.0
        %677 = vmatpush1.msra.mxu0 %v545
        %678 = vmatprep.subr.mxu0 0.0
        %679 = vmatpush1.msra.mxu0 %v542
        %680 = vmatprep.subr.mxu0 0.0
        %681 = vmatpush2.msra.mxu0 0.0
        %682 = vmatprep.subr.mxu0 0.0
        %683 = vmatpush2.msra.mxu0 0.0
        %684 = vmatprep.subr.mxu0 0.0
        %685 = vmatpush2.msra.mxu0 0.0
        %686 = vmatprep.subr.mxu0 0.0
        %687 = vmatpush2.msra.mxu0 0.0
        %688 = vmatprep.subr.mxu0 0.0
        %689 = vmatpush2.msra.mxu0 0.0
        %690 = vmatprep.subr.mxu0 0.0
        %691 = vmatpush2.msra.mxu0 0.0
        %692 = vmatprep.subr.mxu0 0.0
        %693 = vmatpush2.msra.mxu0 0.0
        %694 = vmatprep.subr.mxu0 0.0
        %695 = vmatpush2.msra.mxu0 0.0
        %696 = vmatprep.subr.mxu0 0.0
        %697 = vmatpush2.msra.mxu0 0.0
        %698 = vmatprep.subr.mxu0 0.0
        %699 = vmatpush2.msra.mxu0 0.0
        %700 = vmatprep.subr.mxu0 0.0
        %701 = vmatpush2.msra.mxu0 0.0
        %702 = vmatprep.subr.mxu0 0.0
        %703 = vmatpush2.msra.mxu0 0.0
        %704 = vmatprep.subr.mxu0 0.0
        %705 = vmatpush2.msra.mxu0 0.0
        %706 = vmatprep.subr.mxu0 0.0
        %707 = vmatpush2.msra.mxu0 0.0
        %708 = vmatprep.subr.mxu0 0.0
        %709 = vmatpush2.msra.mxu0 0.0
        %710 = vmatprep.subr.mxu0 0.0
        %711 = vmatpush2.msra.mxu0 0.0
        %712 = vmatprep.mubr.f32.mxu0 0.0
        %713 = vmatmul.mubr.f32.gmra.mxu0 %v569
        %v714 = vpop.f32.mrf.mxu0
        %v715 = vadd.f32 %v481, %v714
        %v716 = vpop.f32.mrf.mxu0
        %717 = vdwg.mxu0
        %vm718 = vcmp.gt.f32.partialorder %v644, 0.0
        %vm719 = vcmp.gt.f32.partialorder %v646, 0.0
        %vm720 = vcmp.gt.f32.partialorder %v715, 0.0
        %v721 = vmul.f32 %v644, 0.2
        %v722 = vmul.f32 %v646, 0.2
        %v723 = vmul.f32 %v715, 0.2
        %v724 = vsel %vm718, %v644, %v721
        %v725 = vsel %vm719, %v646, %v722
        %v726 = vsel %vm720, %v715, %v723
        %v728 = vlaneseq
        %v729 = vshrl.u32 %v728, 7
        %v730 = vsub.s32 0, %v729
        %v731 = vrot.slane %v327, %v730
        %v732 = vlaneseq
        %v733 = vshrl.u32 %v732, 7
        %v734 = vsub.s32 1, %v733
        %v735 = vrot.slane %v327, %v734
        %v736 = vlaneseq
        %v737 = vshrl.u32 %v736, 7
        %v738 = vsub.s32 2, %v737
        %v739 = vrot.slane %v327, %v738
        %v743 = vmul.f32 %v724, %v731
        %v744 = vmul.f32 %v725, %v735
        %v745 = vmul.f32 %v726, %v739
        %v748 = vcombine.low %v743, %v744
        %750 = vst [vmem:[#allocation2 + $0x4] sm:$0xff] %v748
        %751 = vst [vmem:[#allocation2 + $0xc] sm:$0xf] %v745
        %v752 = vld [vmem:[#allocation2] sm:$0xff]
        %v753 = vld [vmem:[#allocation2 + $0x8] sm:$0xff]
        %v754 = vld [vmem:[#allocation2 + $0x10] sm:$0xf]
        %v757 = vcombine.high %v752, %v752
        %v758 = vcombine.high %v753, %v753
        %v761 = vcombine.low %v752, %v752
        %v762 = vcombine.low %v753, %v753
        %763 = vrot.lane.b32.xlu0 %v761, 127
        %v764 = vpop.permute.xlu0 %763
        %765 = vrot.lane.b32.xlu0 %v752, 127
        %v766 = vpop.permute.xlu0 %765
        %767 = vrot.lane.b32.xlu0 %v762, 127
        %v768 = vpop.permute.xlu0 %767
        %769 = vrot.lane.b32.xlu0 %v753, 127
        %v770 = vpop.permute.xlu0 %769
        %v771 = vsel %vm344, %v764, %v766
        %v772 = vsel %vm344, %v766, %v768
        %v773 = vsel %vm344, %v768, %v770
        %778 = vrot.lane.b32.xlu0 %v752, 126
        %v779 = vpop.permute.xlu0 %778
        %780 = vrot.lane.b32.xlu0 %v757, 126
        %v781 = vpop.permute.xlu0 %780
        %782 = vrot.lane.b32.xlu0 %v753, 126
        %v783 = vpop.permute.xlu0 %782
        %784 = vrot.lane.b32.xlu0 %v758, 126
        %v785 = vpop.permute.xlu0 %784
        %v786 = vsel %vm360, %v779, %v781
        %v787 = vsel %vm360, %v781, %v783
        %v788 = vsel %vm360, %v783, %v785
        %793 = vrot.lane.b32.xlu0 %v761, 110
        %v794 = vpop.permute.xlu0 %793
        %795 = vrot.lane.b32.xlu0 %v752, 110
        %v796 = vpop.permute.xlu0 %795
        %797 = vrot.lane.b32.xlu0 %v762, 110
        %v798 = vpop.permute.xlu0 %797
        %799 = vrot.lane.b32.xlu0 %v753, 110
        %v800 = vpop.permute.xlu0 %799
        %v801 = vsel %vm376, %v794, %v796
        %v802 = vsel %vm376, %v796, %v798
        %v803 = vsel %vm376, %v798, %v800
        %808 = vrot.lane.b32.xlu0 %v757, 109
        %v809 = vpop.permute.xlu0 %808
        %810 = vrot.lane.b32.xlu0 %v753, 109
        %v811 = vpop.permute.xlu0 %810
        %812 = vrot.lane.b32.xlu0 %v758, 109
        %v813 = vpop.permute.xlu0 %812
        %v814 = vsel %vm390, %v809, %v811
        %v815 = vsel %vm390, %v811, %v813
        %v821 = vcombine.low %v754, %v754
        %822 = vrot.lane.b32.xlu0 %v752, 108
        %v823 = vpop.permute.xlu0 %822
        %824 = vrot.lane.b32.xlu0 %v762, 108
        %v825 = vpop.permute.xlu0 %824
        %826 = vrot.lane.b32.xlu0 %v753, 108
        %v827 = vpop.permute.xlu0 %826
        %828 = vrot.lane.b32.xlu0 %v821, 108
        %v829 = vpop.permute.xlu0 %828
        %v830 = vsel %vm407, %v823, %v825
        %v831 = vsel %vm407, %v825, %v827
        %v832 = vsel %vm407, %v827, %v829
        %837 = vrot.lane.b32.xlu0 %v757, 92
        %v838 = vpop.permute.xlu0 %837
        %839 = vrot.lane.b32.xlu0 %v753, 92
        %v840 = vpop.permute.xlu0 %839
        %841 = vrot.lane.b32.xlu0 %v758, 92
        %v842 = vpop.permute.xlu0 %841
        %843 = vrot.lane.b32.xlu0 %v754, 92
        %v844 = vpop.permute.xlu0 %843
        %v845 = vsel %vm423, %v838, %v840
        %v846 = vsel %vm423, %v840, %v842
        %v847 = vsel %vm423, %v842, %v844
        %852 = vrot.lane.b32.xlu0 %v752, 91
        %v853 = vpop.permute.xlu0 %852
        %854 = vrot.lane.b32.xlu0 %v762, 91
        %v855 = vpop.permute.xlu0 %854
        %856 = vrot.lane.b32.xlu0 %v753, 91
        %v857 = vpop.permute.xlu0 %856
        %858 = vrot.lane.b32.xlu0 %v821, 91
        %v859 = vpop.permute.xlu0 %858
        %v860 = vsel %vm439, %v853, %v855
        %v861 = vsel %vm439, %v855, %v857
        %v862 = vsel %vm439, %v857, %v859
        %867 = vrot.lane.b32.xlu0 %v757, 90
        %v868 = vpop.permute.xlu0 %867
        %869 = vrot.lane.b32.xlu0 %v753, 90
        %v870 = vpop.permute.xlu0 %869
        %871 = vrot.lane.b32.xlu0 %v758, 90
        %v872 = vpop.permute.xlu0 %871
        %873 = vrot.lane.b32.xlu0 %v754, 90
        %v874 = vpop.permute.xlu0 %873
        %v875 = vsel %vm455, %v868, %v870
        %v876 = vsel %vm455, %v870, %v872
        %v877 = vsel %vm455, %v872, %v874
        %v878 = vsel %vm459, %v752, %v771
        %v879 = vsel %vm459, %v757, %v772
        %v880 = vsel %vm459, %v753, %v773
        %v881 = vsel %vm459, %v758, %v770
        %v882 = vsel %vm459, %v786, %v801
        %v883 = vsel %vm459, %v787, %v802
        %v884 = vsel %vm459, %v788, %v803
        %v885 = vsel %vm459, %v785, %v800
        %v886 = vsel %vm459, %v809, %v823
        %v887 = vsel %vm459, %v814, %v830
        %v888 = vsel %vm459, %v815, %v831
        %v889 = vsel %vm459, %v813, %v832
        %v890 = vsel %vm459, %v838, %v853
        %v891 = vsel %vm459, %v845, %v860
        %v892 = vsel %vm459, %v846, %v861
        %v893 = vsel %vm459, %v847, %v862
        %v894 = vld [vmem:[%s2] sm:$0xf]
        %v895 = vld [vmem:[%s5] sm:$0xf]
        %897 = vset.pattern.permute.xlu0 0
        %898 = vperm.xlu0 %897, %v895
        %v899 = vpop.permute.xlu0 %898
        %917 = vrot.lane.b32.xlu0 %v878, 19
        %v918 = vpop.permute.xlu0 %917
        %919 = vrot.lane.b32.xlu0 %v879, 19
        %v920 = vpop.permute.xlu0 %919
        %921 = vrot.lane.b32.xlu0 %v880, 19
        %v922 = vpop.permute.xlu0 %921
        %923 = vrot.lane.b32.xlu0 %v881, 19
        %v924 = vpop.permute.xlu0 %923
        %925 = vrot.lane.b32.xlu0 %v882, 19
        %v926 = vpop.permute.xlu0 %925
        %927 = vrot.lane.b32.xlu0 %v883, 19
        %v928 = vpop.permute.xlu0 %927
        %929 = vrot.lane.b32.xlu0 %v884, 19
        %v930 = vpop.permute.xlu0 %929
        %931 = vrot.lane.b32.xlu0 %v885, 19
        %v932 = vpop.permute.xlu0 %931
        %933 = vrot.lane.b32.xlu0 %v886, 19
        %v934 = vpop.permute.xlu0 %933
        %935 = vrot.lane.b32.xlu0 %v887, 19
        %v936 = vpop.permute.xlu0 %935
        %937 = vrot.lane.b32.xlu0 %v888, 19
        %v938 = vpop.permute.xlu0 %937
        %939 = vrot.lane.b32.xlu0 %v889, 19
        %v940 = vpop.permute.xlu0 %939
        %941 = vrot.lane.b32.xlu0 %v890, 19
        %v942 = vpop.permute.xlu0 %941
        %943 = vrot.lane.b32.xlu0 %v891, 19
        %v944 = vpop.permute.xlu0 %943
        %945 = vrot.lane.b32.xlu0 %v892, 19
        %v946 = vpop.permute.xlu0 %945
        %947 = vrot.lane.b32.xlu0 %v893, 19
        %v948 = vpop.permute.xlu0 %947
        %949 = vrot.lane.b32.xlu0 %v868, 19
        %v950 = vpop.permute.xlu0 %949
        %951 = vrot.lane.b32.xlu0 %v875, 19
        %v952 = vpop.permute.xlu0 %951
        %953 = vrot.lane.b32.xlu0 %v876, 19
        %v954 = vpop.permute.xlu0 %953
        %955 = vrot.lane.b32.xlu0 %v877, 19
        %v956 = vpop.permute.xlu0 %955
        %v957 = vsel %vm539, %v918, %v920
        %v958 = vsel %vm539, %v920, %v922
        %v959 = vsel %vm539, %v922, %v924
        %v960 = vsel %vm539, %v926, %v928
        %v961 = vsel %vm539, %v928, %v930
        %v962 = vsel %vm539, %v930, %v932
        %v963 = vsel %vm539, %v934, %v936
        %v964 = vsel %vm539, %v936, %v938
        %v965 = vsel %vm539, %v938, %v940
        %v966 = vsel %vm539, %v942, %v944
        %v967 = vsel %vm539, %v944, %v946
        %v968 = vsel %vm539, %v946, %v948
        %v969 = vsel %vm539, %v950, %v952
        %v970 = vsel %vm539, %v952, %v954
        %v971 = vsel %vm539, %v954, %v956
        %v985 = vsel %vm567, %v894, 0
        %v987 = vsel %vm459, %v969, 0
        %v989 = vsel %vm459, %v970, 0
        %v991 = vsel %vm459, %v971, 0
        %993 = vmatprep.subr.mxu0 0.0
        %994 = vmatpush1.msra.mxu0 0.0
        %995 = vmatprep.subr.mxu0 0.0
        %996 = vmatpush1.msra.mxu0 0.0
        %997 = vmatprep.subr.mxu0 0.0
        %998 = vmatpush1.msra.mxu0 0.0
        %999 = vmatprep.subr.mxu0 0.0
        %1000 = vmatpush1.msra.mxu0 0.0
        %1001 = vmatprep.subr.mxu0 0.0
        %1002 = vmatpush1.msra.mxu0 0.0
        %1003 = vmatprep.subr.mxu0 0.0
        %1004 = vmatpush1.msra.mxu0 0.0
        %1005 = vmatprep.subr.mxu0 0.0
        %1006 = vmatpush1.msra.mxu0 0.0
        %1007 = vmatprep.subr.mxu0 0.0
        %1008 = vmatpush1.msra.mxu0 0.0
        %1009 = vmatprep.subr.mxu0 0.0
        %1010 = vmatpush1.msra.mxu0 0.0
        %1011 = vmatprep.subr.mxu0 0.0
        %1012 = vmatpush1.msra.mxu0 0.0
        %1013 = vmatprep.subr.mxu0 0.0
        %1014 = vmatpush1.msra.mxu0 0.0
        %1015 = vmatprep.subr.mxu0 %v989
        %1016 = vmatpush1.msra.mxu0 %v987
        %1017 = vmatprep.subr.mxu0 %v967
        %1018 = vmatpush1.msra.mxu0 %v966
        %1019 = vmatprep.subr.mxu0 %v964
        %1020 = vmatpush1.msra.mxu0 %v963
        %1021 = vmatprep.subr.mxu0 %v961
        %1022 = vmatpush1.msra.mxu0 %v960
        %1023 = vmatprep.subr.mxu0 %v958
        %1024 = vmatpush1.msra.mxu0 %v957
        %1025 = vmatprep.subr.mxu0 0.0
        %1026 = vmatpush2.msra.mxu0 0.0
        %1027 = vmatprep.subr.mxu0 0.0
        %1028 = vmatpush2.msra.mxu0 0.0
        %1029 = vmatprep.subr.mxu0 0.0
        %1030 = vmatpush2.msra.mxu0 0.0
        %1031 = vmatprep.subr.mxu0 0.0
        %1032 = vmatpush2.msra.mxu0 0.0
        %1033 = vmatprep.subr.mxu0 0.0
        %1034 = vmatpush2.msra.mxu0 0.0
        %1035 = vmatprep.subr.mxu0 0.0
        %1036 = vmatpush2.msra.mxu0 0.0
        %1037 = vmatprep.subr.mxu0 0.0
        %1038 = vmatpush2.msra.mxu0 0.0
        %1039 = vmatprep.subr.mxu0 0.0
        %1040 = vmatpush2.msra.mxu0 0.0
        %1041 = vmatprep.subr.mxu0 0.0
        %1042 = vmatpush2.msra.mxu0 0.0
        %1043 = vmatprep.subr.mxu0 0.0
        %1044 = vmatpush2.msra.mxu0 0.0
        %1045 = vmatprep.subr.mxu0 0.0
        %1046 = vmatpush2.msra.mxu0 0.0
        %1047 = vmatprep.subr.mxu0 0.0
        %1048 = vmatpush2.msra.mxu0 0.0
        %1049 = vmatprep.subr.mxu0 0.0
        %1050 = vmatpush2.msra.mxu0 0.0
        %1051 = vmatprep.subr.mxu0 0.0
        %1052 = vmatpush2.msra.mxu0 0.0
        %1053 = vmatprep.subr.mxu0 0.0
        %1054 = vmatpush2.msra.mxu0 0.0
        %1055 = vmatprep.subr.mxu0 0.0
        %1056 = vmatpush2.msra.mxu0 0.0
        %1057 = vmatprep.mubr.f32.mxu0 0.0
        %1058 = vmatmul.mubr.f32.gmra.mxu0 %v985
        %v1059 = vpop.f32.mrf.mxu0
        %v1060 = vadd.f32 %v899, %v1059
        %v1061 = vpop.f32.mrf.mxu0
        %v1062 = vadd.f32 %v899, %v1061
        %1063 = vdwg.mxu0
        %1064 = vmatprep.subr.mxu0 0.0
        %1065 = vmatpush1.msra.mxu0 0.0
        %1066 = vmatprep.subr.mxu0 0.0
        %1067 = vmatpush1.msra.mxu0 0.0
        %1068 = vmatprep.subr.mxu0 0.0
        %1069 = vmatpush1.msra.mxu0 0.0
        %1070 = vmatprep.subr.mxu0 0.0
        %1071 = vmatpush1.msra.mxu0 0.0
        %1072 = vmatprep.subr.mxu0 0.0
        %1073 = vmatpush1.msra.mxu0 0.0
        %1074 = vmatprep.subr.mxu0 0.0
        %1075 = vmatpush1.msra.mxu0 0.0
        %1076 = vmatprep.subr.mxu0 0.0
        %1077 = vmatpush1.msra.mxu0 0.0
        %1078 = vmatprep.subr.mxu0 0.0
        %1079 = vmatpush1.msra.mxu0 0.0
        %1080 = vmatprep.subr.mxu0 0.0
        %1081 = vmatpush1.msra.mxu0 0.0
        %1082 = vmatprep.subr.mxu0 0.0
        %1083 = vmatpush1.msra.mxu0 0.0
        %1084 = vmatprep.subr.mxu0 0.0
        %1085 = vmatpush1.msra.mxu0 0.0
        %1086 = vmatprep.subr.mxu0 0.0
        %1087 = vmatpush1.msra.mxu0 %v991
        %1088 = vmatprep.subr.mxu0 0.0
        %1089 = vmatpush1.msra.mxu0 %v968
        %1090 = vmatprep.subr.mxu0 0.0
        %1091 = vmatpush1.msra.mxu0 %v965
        %1092 = vmatprep.subr.mxu0 0.0
        %1093 = vmatpush1.msra.mxu0 %v962
        %1094 = vmatprep.subr.mxu0 0.0
        %1095 = vmatpush1.msra.mxu0 %v959
        %1096 = vmatprep.subr.mxu0 0.0
        %1097 = vmatpush2.msra.mxu0 0.0
        %1098 = vmatprep.subr.mxu0 0.0
        %1099 = vmatpush2.msra.mxu0 0.0
        %1100 = vmatprep.subr.mxu0 0.0
        %1101 = vmatpush2.msra.mxu0 0.0
        %1102 = vmatprep.subr.mxu0 0.0
        %1103 = vmatpush2.msra.mxu0 0.0
        %1104 = vmatprep.subr.mxu0 0.0
        %1105 = vmatpush2.msra.mxu0 0.0
        %1106 = vmatprep.subr.mxu0 0.0
        %1107 = vmatpush2.msra.mxu0 0.0
        %1108 = vmatprep.subr.mxu0 0.0
        %1109 = vmatpush2.msra.mxu0 0.0
        %1110 = vmatprep.subr.mxu0 0.0
        %1111 = vmatpush2.msra.mxu0 0.0
        %1112 = vmatprep.subr.mxu0 0.0
        %1113 = vmatpush2.msra.mxu0 0.0
        %1114 = vmatprep.subr.mxu0 0.0
        %1115 = vmatpush2.msra.mxu0 0.0
        %1116 = vmatprep.subr.mxu0 0.0
        %1117 = vmatpush2.msra.mxu0 0.0
        %1118 = vmatprep.subr.mxu0 0.0
        %1119 = vmatpush2.msra.mxu0 0.0
        %1120 = vmatprep.subr.mxu0 0.0
        %1121 = vmatpush2.msra.mxu0 0.0
        %1122 = vmatprep.subr.mxu0 0.0
        %1123 = vmatpush2.msra.mxu0 0.0
        %1124 = vmatprep.subr.mxu0 0.0
        %1125 = vmatpush2.msra.mxu0 0.0
        %1126 = vmatprep.subr.mxu0 0.0
        %1127 = vmatpush2.msra.mxu0 0.0
        %1128 = vmatprep.mubr.f32.mxu0 0.0
        %1129 = vmatmul.mubr.f32.gmra.mxu0 %v985
        %v1130 = vpop.f32.mrf.mxu0
        %v1131 = vadd.f32 %v899, %v1130
        %v1132 = vpop.f32.mrf.mxu0
        %1133 = vdwg.mxu0
        %vm1134 = vcmp.gt.f32.partialorder %v1060, 0.0
        %vm1135 = vcmp.gt.f32.partialorder %v1062, 0.0
        %vm1136 = vcmp.gt.f32.partialorder %v1131, 0.0
        %v1137 = vmul.f32 %v1060, 0.2
        %v1138 = vmul.f32 %v1062, 0.2
        %v1139 = vmul.f32 %v1131, 0.2
        %v1140 = vsel %vm1134, %v1060, %v1137
        %v1141 = vsel %vm1135, %v1062, %v1138
        %v1142 = vsel %vm1136, %v1131, %v1139
        %v1143 = vmul.f32 %v1140, %v731
        %v1144 = vmul.f32 %v1141, %v735
        %v1145 = vmul.f32 %v1142, %v739
        %v1148 = vcombine.low %v1143, %v1144
        %1150 = vst [vmem:[#allocation2 + $0x4] sm:$0xff] %v1148
        %1151 = vst [vmem:[#allocation2 + $0xc] sm:$0xf] %v1145
        %v1152 = vld [vmem:[#allocation2] sm:$0xff]
        %v1153 = vld [vmem:[#allocation2 + $0x8] sm:$0xff]
        %v1154 = vld [vmem:[#allocation2 + $0x10] sm:$0xf]
        %v1157 = vcombine.high %v1152, %v1152
        %v1158 = vcombine.high %v1153, %v1153
        %v1161 = vcombine.low %v1152, %v1152
        %v1162 = vcombine.low %v1153, %v1153
        %1163 = vrot.lane.b32.xlu0 %v1161, 127
        %v1164 = vpop.permute.xlu0 %1163
        %1165 = vrot.lane.b32.xlu0 %v1152, 127
        %v1166 = vpop.permute.xlu0 %1165
        %1167 = vrot.lane.b32.xlu0 %v1162, 127
        %v1168 = vpop.permute.xlu0 %1167
        %1169 = vrot.lane.b32.xlu0 %v1153, 127
        %v1170 = vpop.permute.xlu0 %1169
        %v1171 = vsel %vm344, %v1164, %v1166
        %v1172 = vsel %vm344, %v1166, %v1168
        %v1173 = vsel %vm344, %v1168, %v1170
        %1178 = vrot.lane.b32.xlu0 %v1152, 126
        %v1179 = vpop.permute.xlu0 %1178
        %1180 = vrot.lane.b32.xlu0 %v1157, 126
        %v1181 = vpop.permute.xlu0 %1180
        %1182 = vrot.lane.b32.xlu0 %v1153, 126
        %v1183 = vpop.permute.xlu0 %1182
        %1184 = vrot.lane.b32.xlu0 %v1158, 126
        %v1185 = vpop.permute.xlu0 %1184
        %v1186 = vsel %vm360, %v1179, %v1181
        %v1187 = vsel %vm360, %v1181, %v1183
        %v1188 = vsel %vm360, %v1183, %v1185
        %1193 = vrot.lane.b32.xlu0 %v1161, 110
        %v1194 = vpop.permute.xlu0 %1193
        %1195 = vrot.lane.b32.xlu0 %v1152, 110
        %v1196 = vpop.permute.xlu0 %1195
        %1197 = vrot.lane.b32.xlu0 %v1162, 110
        %v1198 = vpop.permute.xlu0 %1197
        %1199 = vrot.lane.b32.xlu0 %v1153, 110
        %v1200 = vpop.permute.xlu0 %1199
        %v1201 = vsel %vm376, %v1194, %v1196
        %v1202 = vsel %vm376, %v1196, %v1198
        %v1203 = vsel %vm376, %v1198, %v1200
        %1208 = vrot.lane.b32.xlu0 %v1157, 109
        %v1209 = vpop.permute.xlu0 %1208
        %1210 = vrot.lane.b32.xlu0 %v1153, 109
        %v1211 = vpop.permute.xlu0 %1210
        %1212 = vrot.lane.b32.xlu0 %v1158, 109
        %v1213 = vpop.permute.xlu0 %1212
        %v1214 = vsel %vm390, %v1209, %v1211
        %v1215 = vsel %vm390, %v1211, %v1213
        %v1221 = vcombine.low %v1154, %v1154
        %1222 = vrot.lane.b32.xlu0 %v1152, 108
        %v1223 = vpop.permute.xlu0 %1222
        %1224 = vrot.lane.b32.xlu0 %v1162, 108
        %v1225 = vpop.permute.xlu0 %1224
        %1226 = vrot.lane.b32.xlu0 %v1153, 108
        %v1227 = vpop.permute.xlu0 %1226
        %1228 = vrot.lane.b32.xlu0 %v1221, 108
        %v1229 = vpop.permute.xlu0 %1228
        %v1230 = vsel %vm407, %v1223, %v1225
        %v1231 = vsel %vm407, %v1225, %v1227
        %v1232 = vsel %vm407, %v1227, %v1229
        %1237 = vrot.lane.b32.xlu0 %v1157, 92
        %v1238 = vpop.permute.xlu0 %1237
        %1239 = vrot.lane.b32.xlu0 %v1153, 92
        %v1240 = vpop.permute.xlu0 %1239
        %1241 = vrot.lane.b32.xlu0 %v1158, 92
        %v1242 = vpop.permute.xlu0 %1241
        %1243 = vrot.lane.b32.xlu0 %v1154, 92
        %v1244 = vpop.permute.xlu0 %1243
        %v1245 = vsel %vm423, %v1238, %v1240
        %v1246 = vsel %vm423, %v1240, %v1242
        %v1247 = vsel %vm423, %v1242, %v1244
        %1252 = vrot.lane.b32.xlu0 %v1152, 91
        %v1253 = vpop.permute.xlu0 %1252
        %1254 = vrot.lane.b32.xlu0 %v1162, 91
        %v1255 = vpop.permute.xlu0 %1254
        %1256 = vrot.lane.b32.xlu0 %v1153, 91
        %v1257 = vpop.permute.xlu0 %1256
        %1258 = vrot.lane.b32.xlu0 %v1221, 91
        %v1259 = vpop.permute.xlu0 %1258
        %v1260 = vsel %vm439, %v1253, %v1255
        %v1261 = vsel %vm439, %v1255, %v1257
        %v1262 = vsel %vm439, %v1257, %v1259
        %1267 = vrot.lane.b32.xlu0 %v1157, 90
        %v1268 = vpop.permute.xlu0 %1267
        %1269 = vrot.lane.b32.xlu0 %v1153, 90
        %v1270 = vpop.permute.xlu0 %1269
        %1271 = vrot.lane.b32.xlu0 %v1158, 90
        %v1272 = vpop.permute.xlu0 %1271
        %1273 = vrot.lane.b32.xlu0 %v1154, 90
        %v1274 = vpop.permute.xlu0 %1273
        %v1275 = vsel %vm455, %v1268, %v1270
        %v1276 = vsel %vm455, %v1270, %v1272
        %v1277 = vsel %vm455, %v1272, %v1274
        %v1278 = vsel %vm459, %v1152, %v1171
        %v1279 = vsel %vm459, %v1157, %v1172
        %v1280 = vsel %vm459, %v1153, %v1173
        %v1281 = vsel %vm459, %v1158, %v1170
        %v1282 = vsel %vm459, %v1186, %v1201
        %v1283 = vsel %vm459, %v1187, %v1202
        %v1284 = vsel %vm459, %v1188, %v1203
        %v1285 = vsel %vm459, %v1185, %v1200
        %v1286 = vsel %vm459, %v1209, %v1223
        %v1287 = vsel %vm459, %v1214, %v1230
        %v1288 = vsel %vm459, %v1215, %v1231
        %v1289 = vsel %vm459, %v1213, %v1232
        %v1290 = vsel %vm459, %v1238, %v1253
        %v1291 = vsel %vm459, %v1245, %v1260
        %v1292 = vsel %vm459, %v1246, %v1261
        %v1293 = vsel %vm459, %v1247, %v1262
        %v1294 = vld [vmem:[%s3] sm:$0xf]
        %v1295 = vld [vmem:[%s6] sm:$0xf]
        %1297 = vset.pattern.permute.xlu0 0
        %1298 = vperm.xlu0 %1297, %v1295
        %v1299 = vpop.permute.xlu0 %1298
        %1317 = vrot.lane.b32.xlu0 %v1278, 19
        %v1318 = vpop.permute.xlu0 %1317
        %1319 = vrot.lane.b32.xlu0 %v1279, 19
        %v1320 = vpop.permute.xlu0 %1319
        %1321 = vrot.lane.b32.xlu0 %v1280, 19
        %v1322 = vpop.permute.xlu0 %1321
        %1323 = vrot.lane.b32.xlu0 %v1281, 19
        %v1324 = vpop.permute.xlu0 %1323
        %1325 = vrot.lane.b32.xlu0 %v1282, 19
        %v1326 = vpop.permute.xlu0 %1325
        %1327 = vrot.lane.b32.xlu0 %v1283, 19
        %v1328 = vpop.permute.xlu0 %1327
        %1329 = vrot.lane.b32.xlu0 %v1284, 19
        %v1330 = vpop.permute.xlu0 %1329
        %1331 = vrot.lane.b32.xlu0 %v1285, 19
        %v1332 = vpop.permute.xlu0 %1331
        %1333 = vrot.lane.b32.xlu0 %v1286, 19
        %v1334 = vpop.permute.xlu0 %1333
        %1335 = vrot.lane.b32.xlu0 %v1287, 19
        %v1336 = vpop.permute.xlu0 %1335
        %1337 = vrot.lane.b32.xlu0 %v1288, 19
        %v1338 = vpop.permute.xlu0 %1337
        %1339 = vrot.lane.b32.xlu0 %v1289, 19
        %v1340 = vpop.permute.xlu0 %1339
        %1341 = vrot.lane.b32.xlu0 %v1290, 19
        %v1342 = vpop.permute.xlu0 %1341
        %1343 = vrot.lane.b32.xlu0 %v1291, 19
        %v1344 = vpop.permute.xlu0 %1343
        %1345 = vrot.lane.b32.xlu0 %v1292, 19
        %v1346 = vpop.permute.xlu0 %1345
        %1347 = vrot.lane.b32.xlu0 %v1293, 19
        %v1348 = vpop.permute.xlu0 %1347
        %1349 = vrot.lane.b32.xlu0 %v1268, 19
        %v1350 = vpop.permute.xlu0 %1349
        %1351 = vrot.lane.b32.xlu0 %v1275, 19
        %v1352 = vpop.permute.xlu0 %1351
        %1353 = vrot.lane.b32.xlu0 %v1276, 19
        %v1354 = vpop.permute.xlu0 %1353
        %1355 = vrot.lane.b32.xlu0 %v1277, 19
        %v1356 = vpop.permute.xlu0 %1355
        %v1357 = vsel %vm539, %v1318, %v1320
        %v1358 = vsel %vm539, %v1320, %v1322
        %v1359 = vsel %vm539, %v1322, %v1324
        %v1360 = vsel %vm539, %v1326, %v1328
        %v1361 = vsel %vm539, %v1328, %v1330
        %v1362 = vsel %vm539, %v1330, %v1332
        %v1363 = vsel %vm539, %v1334, %v1336
        %v1364 = vsel %vm539, %v1336, %v1338
        %v1365 = vsel %vm539, %v1338, %v1340
        %v1366 = vsel %vm539, %v1342, %v1344
        %v1367 = vsel %vm539, %v1344, %v1346
        %v1368 = vsel %vm539, %v1346, %v1348
        %v1369 = vsel %vm539, %v1350, %v1352
        %v1370 = vsel %vm539, %v1352, %v1354
        %v1371 = vsel %vm539, %v1354, %v1356
        %v1385 = vsel %vm567, %v1294, 0
        %v1387 = vsel %vm459, %v1369, 0
        %v1389 = vsel %vm459, %v1370, 0
        %v1391 = vsel %vm459, %v1371, 0
        %1393 = vmatprep.subr.mxu0 0.0
        %1394 = vmatpush1.msra.mxu0 0.0
        %1395 = vmatprep.subr.mxu0 0.0
        %1396 = vmatpush1.msra.mxu0 0.0
        %1397 = vmatprep.subr.mxu0 0.0
        %1398 = vmatpush1.msra.mxu0 0.0
        %1399 = vmatprep.subr.mxu0 0.0
        %1400 = vmatpush1.msra.mxu0 0.0
        %1401 = vmatprep.subr.mxu0 0.0
        %1402 = vmatpush1.msra.mxu0 0.0
        %1403 = vmatprep.subr.mxu0 0.0
        %1404 = vmatpush1.msra.mxu0 0.0
        %1405 = vmatprep.subr.mxu0 0.0
        %1406 = vmatpush1.msra.mxu0 0.0
        %1407 = vmatprep.subr.mxu0 0.0
        %1408 = vmatpush1.msra.mxu0 0.0
        %1409 = vmatprep.subr.mxu0 0.0
        %1410 = vmatpush1.msra.mxu0 0.0
        %1411 = vmatprep.subr.mxu0 0.0
        %1412 = vmatpush1.msra.mxu0 0.0
        %1413 = vmatprep.subr.mxu0 0.0
        %1414 = vmatpush1.msra.mxu0 0.0
        %1415 = vmatprep.subr.mxu0 %v1389
        %1416 = vmatpush1.msra.mxu0 %v1387
        %1417 = vmatprep.subr.mxu0 %v1367
        %1418 = vmatpush1.msra.mxu0 %v1366
        %1419 = vmatprep.subr.mxu0 %v1364
        %1420 = vmatpush1.msra.mxu0 %v1363
        %1421 = vmatprep.subr.mxu0 %v1361
        %1422 = vmatpush1.msra.mxu0 %v1360
        %1423 = vmatprep.subr.mxu0 %v1358
        %1424 = vmatpush1.msra.mxu0 %v1357
        %1425 = vmatprep.subr.mxu0 0.0
        %1426 = vmatpush2.msra.mxu0 0.0
        %1427 = vmatprep.subr.mxu0 0.0
        %1428 = vmatpush2.msra.mxu0 0.0
        %1429 = vmatprep.subr.mxu0 0.0
        %1430 = vmatpush2.msra.mxu0 0.0
        %1431 = vmatprep.subr.mxu0 0.0
        %1432 = vmatpush2.msra.mxu0 0.0
        %1433 = vmatprep.subr.mxu0 0.0
        %1434 = vmatpush2.msra.mxu0 0.0
        %1435 = vmatprep.subr.mxu0 0.0
        %1436 = vmatpush2.msra.mxu0 0.0
        %1437 = vmatprep.subr.mxu0 0.0
        %1438 = vmatpush2.msra.mxu0 0.0
        %1439 = vmatprep.subr.mxu0 0.0
        %1440 = vmatpush2.msra.mxu0 0.0
        %1441 = vmatprep.subr.mxu0 0.0
        %1442 = vmatpush2.msra.mxu0 0.0
        %1443 = vmatprep.subr.mxu0 0.0
        %1444 = vmatpush2.msra.mxu0 0.0
        %1445 = vmatprep.subr.mxu0 0.0
        %1446 = vmatpush2.msra.mxu0 0.0
        %1447 = vmatprep.subr.mxu0 0.0
        %1448 = vmatpush2.msra.mxu0 0.0
        %1449 = vmatprep.subr.mxu0 0.0
        %1450 = vmatpush2.msra.mxu0 0.0
        %1451 = vmatprep.subr.mxu0 0.0
        %1452 = vmatpush2.msra.mxu0 0.0
        %1453 = vmatprep.subr.mxu0 0.0
        %1454 = vmatpush2.msra.mxu0 0.0
        %1455 = vmatprep.subr.mxu0 0.0
        %1456 = vmatpush2.msra.mxu0 0.0
        %1457 = vmatprep.mubr.f32.mxu0 0.0
        %1458 = vmatmul.mubr.f32.gmra.mxu0 %v1385
        %v1459 = vpop.f32.mrf.mxu0
        %v1460 = vadd.f32 %v1299, %v1459
        %v1461 = vpop.f32.mrf.mxu0
        %v1462 = vadd.f32 %v1299, %v1461
        %1463 = vdwg.mxu0
        %1464 = vmatprep.subr.mxu0 0.0
        %1465 = vmatpush1.msra.mxu0 0.0
        %1466 = vmatprep.subr.mxu0 0.0
        %1467 = vmatpush1.msra.mxu0 0.0
        %1468 = vmatprep.subr.mxu0 0.0
        %1469 = vmatpush1.msra.mxu0 0.0
        %1470 = vmatprep.subr.mxu0 0.0
        %1471 = vmatpush1.msra.mxu0 0.0
        %1472 = vmatprep.subr.mxu0 0.0
        %1473 = vmatpush1.msra.mxu0 0.0
        %1474 = vmatprep.subr.mxu0 0.0
        %1475 = vmatpush1.msra.mxu0 0.0
        %1476 = vmatprep.subr.mxu0 0.0
        %1477 = vmatpush1.msra.mxu0 0.0
        %1478 = vmatprep.subr.mxu0 0.0
        %1479 = vmatpush1.msra.mxu0 0.0
        %1480 = vmatprep.subr.mxu0 0.0
        %1481 = vmatpush1.msra.mxu0 0.0
        %1482 = vmatprep.subr.mxu0 0.0
        %1483 = vmatpush1.msra.mxu0 0.0
        %1484 = vmatprep.subr.mxu0 0.0
        %1485 = vmatpush1.msra.mxu0 0.0
        %1486 = vmatprep.subr.mxu0 0.0
        %1487 = vmatpush1.msra.mxu0 %v1391
        %1488 = vmatprep.subr.mxu0 0.0
        %1489 = vmatpush1.msra.mxu0 %v1368
        %1490 = vmatprep.subr.mxu0 0.0
        %1491 = vmatpush1.msra.mxu0 %v1365
        %1492 = vmatprep.subr.mxu0 0.0
        %1493 = vmatpush1.msra.mxu0 %v1362
        %1494 = vmatprep.subr.mxu0 0.0
        %1495 = vmatpush1.msra.mxu0 %v1359
        %1496 = vmatprep.subr.mxu0 0.0
        %1497 = vmatpush2.msra.mxu0 0.0
        %1498 = vmatprep.subr.mxu0 0.0
        %1499 = vmatpush2.msra.mxu0 0.0
        %1500 = vmatprep.subr.mxu0 0.0
        %1501 = vmatpush2.msra.mxu0 0.0
        %1502 = vmatprep.subr.mxu0 0.0
        %1503 = vmatpush2.msra.mxu0 0.0
        %1504 = vmatprep.subr.mxu0 0.0
        %1505 = vmatpush2.msra.mxu0 0.0
        %1506 = vmatprep.subr.mxu0 0.0
        %1507 = vmatpush2.msra.mxu0 0.0
        %1508 = vmatprep.subr.mxu0 0.0
        %1509 = vmatpush2.msra.mxu0 0.0
        %1510 = vmatprep.subr.mxu0 0.0
        %1511 = vmatpush2.msra.mxu0 0.0
        %1512 = vmatprep.subr.mxu0 0.0
        %1513 = vmatpush2.msra.mxu0 0.0
        %1514 = vmatprep.subr.mxu0 0.0
        %1515 = vmatpush2.msra.mxu0 0.0
        %1516 = vmatprep.subr.mxu0 0.0
        %1517 = vmatpush2.msra.mxu0 0.0
        %1518 = vmatprep.subr.mxu0 0.0
        %1519 = vmatpush2.msra.mxu0 0.0
        %1520 = vmatprep.subr.mxu0 0.0
        %1521 = vmatpush2.msra.mxu0 0.0
        %1522 = vmatprep.subr.mxu0 0.0
        %1523 = vmatpush2.msra.mxu0 0.0
        %1524 = vmatprep.subr.mxu0 0.0
        %1525 = vmatpush2.msra.mxu0 0.0
        %1526 = vmatprep.subr.mxu0 0.0
        %1527 = vmatpush2.msra.mxu0 0.0
        %1528 = vmatprep.mubr.f32.mxu0 0.0
        %1529 = vmatmul.mubr.f32.gmra.mxu0 %v1385
        %v1530 = vpop.f32.mrf.mxu0
        %v1531 = vadd.f32 %v1299, %v1530
        %v1532 = vpop.f32.mrf.mxu0
        %1533 = vdwg.mxu0
        %v1534 = vrot.slane %v324, 4
        %v1535 = vrot.slane %v325, 4
        %v1536 = vsel %vm459, %v1534, %v1535
        %v1541 = vcombine.low %v1460, %v1462
        %v1543 = vadd.f32 %v1536, %v1541
        %v1544 = vadd.f32 %v1535, %v1531
        %1545 = vst [vmem:[%s321] sm:$0xff] %v1543
        %1546 = vst [vmem:[%s321 + $0x8] sm:$0xf] %v1544
        %s1547 = sand.u32 %s206, 1
        %s1548 = scalar_lea.sflag [#allocation5], %s1547
        %s1549 = sand.u32 %s206, 1
        %s1550 = smul.addr %s1549, 12
        %s1551 = scalar_lea.vmem [#allocation6], %s1550
        // Predicated region
        $region57: #{tpu_custom_call.1} parent=51 // pred_check
          %p1552 = pneg %p216
        $region58: #{tpu_custom_call.1} parent=51 // pred_check_branch
          %1554 = sbr.rel (%p1552) target = $region60
        $region59: #{tpu_custom_call.1} parent=51 // pred_region
          %s1556 = ssub.s32 192, 192
          %1557 = vsyncadd %s1548, %s1556
          %s1558 = smul.addr %s25, 3
          %s1559 = smul.addr %s1558, 64
          %s1560 = scalar_lea.hbm %s8, %s1559
          %s1562 = sshll.u32 %s1551, 4
          %s1563 = int_to_ptr.vmem [resolvable:$true] %s1562
          %1565 = dma.vmem_to_hbm [thread:$0]  %s1563, 192, %s1560, %s1548
        $region60: #{tpu_custom_call.1} parent=51 // pred_fallthru
          _
      $region52: #{tpu_custom_call.1} parent=5 // pred_fallthru
        _
      %p1566 = scmp.le.s32.totalorder 2, %s20
      // Predicated region
      $region61: #{tpu_custom_call.1} parent=5 // pred_check
        %p1567 = pneg %p1566
      $region62: #{tpu_custom_call.1} parent=5 // pred_check_branch
        %1569 = sbr.rel (%p1567) target = $region64
      $region63: #{tpu_custom_call.1} parent=5 // pred_region
        %s1570 = ssub.s32 %s20, 2
        // Predicated region
        $region65: #{tpu_custom_call.1} parent=63 // pred_check
          %p1571 = pneg %p222
        $region66: #{tpu_custom_call.1} parent=63 // pred_check_branch
          %1573 = sbr.rel (%p1571) target = $region68
        $region67: #{tpu_custom_call.1} parent=63 // pred_region
          %s1574 = sand.u32 %s207, 1
          %s1575 = scalar_lea.sflag [#allocation5], %s1574
          %s1576 = sand.u32 %s207, 1
          %s1577 = smul.addr %s1576, 12
          %s1578 = scalar_lea.vmem [#allocation6], %s1577
          %1579 = dma.done %s1575, 192
        $region68: #{tpu_custom_call.1} parent=63 // pred_fallthru
          _
      $region64: #{tpu_custom_call.1} parent=5 // pred_fallthru
        _
    $region6: #{tpu_custom_call.1} parent=1 // loop_footer
      %s24 = sadd.s32 1, %s20
    $region7: #{tpu_custom_call.1} parent=1 // loop_footer_branch
      %19 = sbr.rel target = $region3
    $region8: #{tpu_custom_call.1} parent=1 // loop_exit
      _
    %1580 = vsyncpa [#allocation4], 1
    %s1581 = scalar_lea.sflag [#allocation4], 1
    %1582 = vsyncpa %s1581, 1
    %1583 = vsyncpa [#allocation5], 1
    %s1584 = scalar_lea.sflag [#allocation5], 1
    %1585 = vsyncpa %s1584, 1

</llo_original>
